<compile_context>
chip_gen: v6e
topology: v6e:2x2x1
jax: 0.10.0
libtpu: 0.0.40
codegen_flags: <defaults>
</compile_context>

<pallas_src>
import jax
import jax.numpy as jnp
from jax.experimental import pallas as pl
from jax.experimental.pallas import tpu as pltpu


# --------------------------------------------------------------------------- utils

def _round_up(v, m):
    return ((v + m - 1) // m) * m


def _pad_cols(a, to):
    return a if a.shape[1] == to else jnp.pad(a, ((0, 0), (0, to - a.shape[1])))


def _pad_rows(a, to):
    return a if a.shape[0] == to else jnp.pad(a, ((0, to - a.shape[0]), (0, 0)))


# --------------------------------------------------------------------------- kernel

def _meta_gn_kernel(src_col_ref, dst_col_ref, dst_row_ref,      # edge indices
                    x_ref, f_ref, e_ref,                        # features
                    ew1s_ref, ew1d_ref, ew1e_ref, eb1_ref,      # edge MLP layer 1 (split W1)
                    ew2_ref, eb2_ref,                           # edge MLP layer 2
                    nw1x_ref, nw1a_ref, nw1f_ref, nb1_ref,      # node MLP layer 1 (split W1)
                    nw2_ref, nb2_ref,                           # node MLP layer 2
                    e_out_ref, x_out_ref,                       # outputs
                    xs_sc, xd_sc, agg_sc, cnt_sc):              # VMEM scratch
    """Fused GN block. Grid axis 0 walks tiles of the (padded) edge set.

    Per tile: edge MLP (one-hot MXU gathers of the per-node projections), store e',
    accumulate the scatter-mean numerator/denominator into f32 VMEM scratch.
    Last step: finish the mean and run the node MLP.
    """
    k = pl.program_id(0)
    md = xs_sc.dtype                       # MXU operand dtype (f32 or bf16)
    te = e_ref.shape[0]                    # edge-tile rows
    n = x_ref.shape[0]                     # number of nodes

    @pl.when(k == 0)
    def _init():
        # Node-side first-layer projections: computed once over N rows (not per edge).
        xs_sc[...] = jnp.dot(x_ref[...], ew1s_ref[...],
                             preferred_element_type=jnp.float32).astype(md)
        xd_sc[...] = jnp.dot(x_ref[...], ew1d_ref[...],
                             preferred_element_type=jnp.float32).astype(md)
        agg_sc[...] = jnp.zeros_like(agg_sc)
        cnt_sc[...] = jnp.zeros_like(cnt_sc)

    # ---- edge model on this tile (row gather via one-hot matmul on the MXU) ------
    lane_nodes = jax.lax.broadcasted_iota(jnp.int32, (te, n), 1)      # node ids along lanes
    oh_src = (src_col_ref[...] == lane_nodes).astype(jnp.float32)     # (te, n)
    oh_dst = (dst_col_ref[...] == lane_nodes).astype(jnp.float32)     # (te, n)

    pre = (jnp.dot(oh_src.astype(md), xs_sc[...], preferred_element_type=jnp.float32)
           + jnp.dot(oh_dst.astype(md), xd_sc[...], preferred_element_type=jnp.float32)
           + jnp.dot(e_ref[...], ew1e_ref[...], preferred_element_type=jnp.float32)
           + eb1_ref[...])
    h = jnp.maximum(pre, 0.0)                                          # f32 elementwise
    e_new = (jnp.dot(h.astype(md), ew2_ref[...], preferred_element_type=jnp.float32)
             + eb2_ref[...])                                           # (te, fe_pad) f32
    e_out_ref[...] = e_new.astype(e_out_ref.dtype)

    # ---- scatter-mean accumulation (one-hot built pre-transposed, all MXU) -------
    sub_nodes = jax.lax.broadcasted_iota(jnp.int32, (n, te), 0)        # node ids along sublanes
    oh_dst_nt = (dst_row_ref[...] == sub_nodes).astype(jnp.float32)    # (n, te), lane-dense
    agg_sc[...] += jnp.dot(oh_dst_nt.astype(md), e_new.astype(md),
                           preferred_element_type=jnp.float32)
    cnt_sc[...] += jnp.dot(oh_dst_nt, jnp.ones((te, 1), jnp.float32),
                           preferred_element_type=jnp.float32)         # counts stay f32

    # ---- node model, once all edge tiles have been accumulated -------------------
    @pl.when(k == pl.num_programs(0) - 1)
    def _finalize():
        cnt = cnt_sc[...]
        agg = jnp.where(cnt > 0.0, agg_sc[...] / jnp.maximum(cnt, 1.0), 0.0)
        pre_n = (jnp.dot(x_ref[...], nw1x_ref[...], preferred_element_type=jnp.float32)
                 + jnp.dot(agg.astype(md), nw1a_ref[...],
                           preferred_element_type=jnp.float32)
                 + jnp.dot(f_ref[...], nw1f_ref[...], preferred_element_type=jnp.float32)
                 + nb1_ref[...])
        hn = jnp.maximum(pre_n, 0.0)
        x_out_ref[...] = (jnp.dot(hn.astype(md), nw2_ref[...],
                                  preferred_element_type=jnp.float32)
                          + nb2_ref[...]).astype(x_out_ref.dtype)


# --------------------------------------------------------------------------- wrapper

def meta_layer_forward(params, x, edge_index, edge_attr, f, u=None, batch=None,
                       *, block_e=128, use_bf16=False):
    """Pallas implementation of MetaLayer.forward.  Returns (x_new, edge_attr_new)."""
    # TODO(synk): u and batch are accepted but unused (None in this synthetic setup),
    # matching a GN block whose sub-MLPs do not consume globals.
    del u, batch
    n, fx = x.shape
    e, fe = edge_attr.shape
    h = params["e_w1_src"].shape[1]
    ff = f.shape[1]
    fe_out = params["e_w2"].shape[1]
    fx_out = params["n_w2"].shape[1]

    md = jnp.bfloat16 if use_bf16 else jnp.float32
    fe_pad = _round_up(fe_out, 128)       # lane-dense e' / aggregate width
    fx_pad = _round_up(fx_out, 128)       # lane-dense x' width

    assert block_e % 128 == 0, "edge tile must be a multiple of 128 lanes"
    e_pad = _round_up(max(e, 1), block_e)

    # Pad the edge set to a whole number of tiles.  Padded edges use the sentinel
    # node id `n` (out of range): their one-hot rows are all-zero, so they gather
    # nothing, scatter nothing, and their e' rows are sliced off below.
    src = edge_index[0].astype(jnp.int32)
    dst = edge_index[1].astype(jnp.int32)
    pad = e_pad - e
    if pad:
        sentinel = jnp.full((pad,), n, jnp.int32)
        src = jnp.concatenate([src, sentinel])
        dst = jnp.concatenate([dst, sentinel])
        edge_attr_p = jnp.concatenate(
            [edge_attr, jnp.zeros((pad, fe), edge_attr.dtype)], axis=0)
    else:
        edge_attr_p = edge_attr
    src_col = src.reshape(e_pad, 1)       # sublane copy -> (te, n) gather one-hots
    dst_col = dst.reshape(e_pad, 1)
    dst_row = dst.reshape(1, e_pad)       # lane-dense copy -> (n, te) scatter one-hot

    # Zero-pad output-lane dims of the weights (results sliced back afterwards).
    cast = lambda a: a.astype(md)
    ew2 = _pad_cols(params["e_w2"], fe_pad)
    eb2 = _pad_cols(params["e_b2"], fe_pad)
    nw1a = _pad_rows(params["n_w1a"], fe_pad)
    nw2 = _pad_cols(params["n_w2"], fx_pad)
    nb2 = _pad_cols(params["n_b2"], fx_pad)

    def resident(shape):
        # Whole-array block with a constant index_map -> DMA'd once, stays in VMEM.
        return pl.BlockSpec(shape, lambda *_: (0,) * len(shape))

    grid_spec = pltpu.PrefetchScalarGridSpec(
        num_scalar_prefetch=0,
        grid=(e_pad // block_e,),
        in_specs=[
            pl.BlockSpec((block_e, 1), lambda k: (k, 0)),      # src_col
            pl.BlockSpec((block_e, 1), lambda k: (k, 0)),      # dst_col
            pl.BlockSpec((1, block_e), lambda k: (0, k)),      # dst_row
            resident((n, fx)),                                 # x
            resident((n, ff)),                                 # f
            pl.BlockSpec((block_e, fe), lambda k: (k, 0)),     # edge_attr
            resident((fx, h)), resident((fx, h)), resident((fe, h)), resident((1, h)),
            resident((h, fe_pad)), resident((1, fe_pad)),
            resident((fx, h)), resident((fe_pad, h)), resident((ff, h)), resident((1, h)),
            resident((h, fx_pad)), resident((1, fx_pad)),
        ],
        out_specs=[
            pl.BlockSpec((block_e, fe_pad), lambda k: (k, 0)),  # e' per tile (lane-dense)
            pl.BlockSpec((n, fx_pad), lambda k: (0, 0)),        # x' written at last step
        ],
        scratch_shapes=[
            pltpu.VMEM((n, h), md),                 # x @ W1_src
            pltpu.VMEM((n, h), md),                 # x @ W1_dst
            pltpu.VMEM((n, fe_pad), jnp.float32),   # scatter-sum accumulator (f32)
            pltpu.VMEM((n, 1), jnp.float32),        # in-degree counts (f32)
        ],
    )

    e_new_pad, x_new_pad = pl.pallas_call(
        _meta_gn_kernel,
        grid_spec=grid_spec,
        out_shape=(
            jax.ShapeDtypeStruct((e_pad, fe_pad), jnp.float32),
            jax.ShapeDtypeStruct((n, fx_pad), jnp.float32),
        ),
        compiler_params=pltpu.CompilerParams(
            # Single reduction axis over edge tiles (carried aggregate) -> arbitrary.
            # TODO(synk): at production scale add a parallel node-tile axis so the
            # grid shards across v7x's two TensorCores.
            dimension_semantics=("arbitrary",),
            vmem_limit_bytes=32 * 1024 * 1024,
        ),
    )(src_col, dst_col, dst_row,
      cast(x), cast(f), cast(edge_attr_p),
      cast(params["e_w1_src"]), cast(params["e_w1_dst"]), cast(params["e_w1_e"]),
      params["e_b1"],
      cast(ew2), eb2,
      cast(params["n_w1x"]), cast(nw1a), cast(params["n_w1f"]), params["n_b1"],
      cast(nw2), nb2)

    return x_new_pad[:, :fx_out], e_new_pad[:e, :fe_out]


# --------------------------------------------------------------------------- reference

def meta_layer_reference(params, x, edge_index, edge_attr, f):
    src, dest = edge_index[0], edge_index[1]
    n = x.shape[0]
    h = jnp.maximum(x[src] @ params["e_w1_src"] + x[dest] @ params["e_w1_dst"]
                    + edge_attr @ params["e_w1_e"] + params["e_b1"], 0.0)
    e_new = h @ params["e_w2"] + params["e_b2"]

    agg_sum = jnp.zeros((n, e_new.shape[1]), jnp.float32).at[dest].add(e_new)
    counts = jnp.zeros((n, 1), jnp.float32).at[dest].add(1.0)
    agg = jnp.where(counts > 0.0, agg_sum / jnp.maximum(counts, 1.0), 0.0)

    pre = (x @ params["n_w1x"] + agg @ params["n_w1a"] + f @ params["n_w1f"]
           + params["n_b1"])
    x_new = jnp.maximum(pre, 0.0) @ params["n_w2"] + params["n_b2"]
    return x_new, e_new


# --------------------------------------------------------------------------- params

def make_params(key, fx, fe, ff, h, fe_out, fx_out):
    ks = jax.random.split(key, 12)

    def lin(k, fan_in, shape):
        return jax.random.normal(k, shape, jnp.float32) / jnp.sqrt(fan_in)

    fan_e1 = 2 * fx + fe
    fan_n1 = fx + fe_out + ff
    return {
        # edge MLP: (2Fx+Fe) -> H -> Fe_out, W1 stored pre-split (src / dst / e).
        "e_w1_src": lin(ks[0], fan_e1, (fx, h)),
        "e_w1_dst": lin(ks[1], fan_e1, (fx, h)),
        "e_w1_e":   lin(ks[2], fan_e1, (fe, h)),
        "e_b1":     lin(ks[3], h, (1, h)),
        "e_w2":     lin(ks[4], h, (h, fe_out)),
        "e_b2":     lin(ks[5], fe_out, (1, fe_out)),
        # node MLP: (Fx + Fe_out + Ff) -> H -> Fx_out, W1 stored pre-split.
        "n_w1x":    lin(ks[6], fan_n1, (fx, h)),
        "n_w1a":    lin(ks[7], fan_n1, (fe_out, h)),
        "n_w1f":    lin(ks[8], fan_n1, (ff, h)),
        "n_b1":     lin(ks[9], h, (1, h)),
        "n_w2":     lin(ks[10], h, (h, fx_out)),
        "n_b2":     lin(ks[11], fx_out, (1, fx_out)),
    }


# --------------------------------------------------------------------------- main

if __name__ == "__main__":
    N, E = 16, 200             # nodes, edges (E padded to 256 -> 2 edge tiles of 128)
    Fx, Fe, Ff = 32, 16, 8     # node / edge / extra-node feature dims
    H = 128                    # MLP hidden, lane-aligned (review: H -> 128)
    Fe_out, Fx_out = 16, 32    # logical output dims (lane-padded to 128 internally)

    key = jax.random.PRNGKey(0)
    k_x, k_e, k_f, k_idx, k_p = jax.random.split(key, 5)

    x = jax.random.normal(k_x, (N, Fx), jnp.float32)
    edge_attr = jax.random.normal(k_e, (E, Fe), jnp.float32)
    f = jax.random.normal(k_f, (N, Ff), jnp.float32)
    edge_index = jax.random.randint(k_idx, (2, E), 0, N, jnp.int32)
    params = make_params(k_p, Fx, Fe, Ff, H, Fe_out, Fx_out)

    x_ref, e_ref = meta_layer_reference(params, x, edge_index, edge_attr, f)

    # f32 MXU path: tight agreement with the f32 reference.
    x_new, e_new = meta_layer_forward(params, x, edge_index, edge_attr, f,
                                      u=None, batch=None,
                                      block_e=128, use_bf16=False)
    jax.block_until_ready((x_new, e_new))
    assert x_new.shape == (N, Fx_out) and e_new.shape == (E, Fe_out)
    assert jnp.allclose(x_new, x_ref, atol=1e-4, rtol=1e-4)
    assert jnp.allclose(e_new, e_ref, atol=1e-4, rtol=1e-4)

    # bf16 MXU path (v6e/v7x recommendation): operands quantized, so loose tolerance;
    # one-hots/counts/aggregation and all elementwise math stay in f32.
    x_bf, e_bf = meta_layer_forward(params, x, edge_index, edge_attr, f,
                                    block_e=128, use_bf16=True)
    jax.block_until_ready((x_bf, e_bf))
    assert jnp.allclose(x_bf, x_ref, atol=1e-1, rtol=1e-1)
    assert jnp.allclose(e_bf, e_ref, atol=1e-1, rtol=1e-1)

    print("KERNEL_OK")
</pallas_src>

<mosaic_0001>
module attributes {stable_mosaic.version = 11 : i64} {
  func.func @_meta_gn_kernel(%arg0: i32, %arg1: memref<128x1xi32, #tpu.memory_space<vmem>>, %arg2: memref<128x1xi32, #tpu.memory_space<vmem>>, %arg3: memref<1x128xi32, #tpu.memory_space<vmem>>, %arg4: memref<16x32xf32, #tpu.memory_space<vmem>>, %arg5: memref<16x8xf32, #tpu.memory_space<vmem>>, %arg6: memref<128x16xf32, #tpu.memory_space<vmem>>, %arg7: memref<32x128xf32, #tpu.memory_space<vmem>>, %arg8: memref<32x128xf32, #tpu.memory_space<vmem>>, %arg9: memref<16x128xf32, #tpu.memory_space<vmem>>, %arg10: memref<1x128xf32, #tpu.memory_space<vmem>>, %arg11: memref<128x128xf32, #tpu.memory_space<vmem>>, %arg12: memref<1x128xf32, #tpu.memory_space<vmem>>, %arg13: memref<32x128xf32, #tpu.memory_space<vmem>>, %arg14: memref<128x128xf32, #tpu.memory_space<vmem>>, %arg15: memref<8x128xf32, #tpu.memory_space<vmem>>, %arg16: memref<1x128xf32, #tpu.memory_space<vmem>>, %arg17: memref<128x128xf32, #tpu.memory_space<vmem>>, %arg18: memref<1x128xf32, #tpu.memory_space<vmem>>, %arg19: memref<128x128xf32, #tpu.memory_space<vmem>>, %arg20: memref<16x128xf32, #tpu.memory_space<vmem>>, %arg21: memref<16x128xf32, #tpu.memory_space<vmem>>, %arg22: memref<16x128xf32, #tpu.memory_space<vmem>>, %arg23: memref<16x128xf32, #tpu.memory_space<vmem>>, %arg24: memref<16x1xf32, #tpu.memory_space<vmem>>) attributes {dimension_semantics = [#tpu.dimension_semantics<arbitrary>], iteration_bounds = array<i64: 2>, scalar_prefetch = 0 : i64, scratch_operands = 4 : i64, tpu.core_type = #tpu.core_type<tc>, window_params = [{transform_indices = @transform_0, window_bounds = array<i64: 128, 1>}, {transform_indices = @transform_1, window_bounds = array<i64: 128, 1>}, {transform_indices = @transform_2, window_bounds = array<i64: 1, 128>}, {pipeline_mode = #tpu.pipeline_mode<synchronous>, transform_indices = @transform_3, window_bounds = array<i64: 16, 32>}, {pipeline_mode = #tpu.pipeline_mode<synchronous>, transform_indices = @transform_4, window_bounds = array<i64: 16, 8>}, {transform_indices = @transform_5, window_bounds = array<i64: 128, 16>}, {pipeline_mode = #tpu.pipeline_mode<synchronous>, transform_indices = @transform_6, window_bounds = array<i64: 32, 128>}, {pipeline_mode = #tpu.pipeline_mode<synchronous>, transform_indices = @transform_7, window_bounds = array<i64: 32, 128>}, {pipeline_mode = #tpu.pipeline_mode<synchronous>, transform_indices = @transform_8, window_bounds = array<i64: 16, 128>}, {pipeline_mode = #tpu.pipeline_mode<synchronous>, transform_indices = @transform_9, window_bounds = array<i64: 1, 128>}, {pipeline_mode = #tpu.pipeline_mode<synchronous>, transform_indices = @transform_10, window_bounds = array<i64: 128, 128>}, {pipeline_mode = #tpu.pipeline_mode<synchronous>, transform_indices = @transform_11, window_bounds = array<i64: 1, 128>}, {pipeline_mode = #tpu.pipeline_mode<synchronous>, transform_indices = @transform_12, window_bounds = array<i64: 32, 128>}, {pipeline_mode = #tpu.pipeline_mode<synchronous>, transform_indices = @transform_13, window_bounds = array<i64: 128, 128>}, {pipeline_mode = #tpu.pipeline_mode<synchronous>, transform_indices = @transform_14, window_bounds = array<i64: 8, 128>}, {pipeline_mode = #tpu.pipeline_mode<synchronous>, transform_indices = @transform_15, window_bounds = array<i64: 1, 128>}, {pipeline_mode = #tpu.pipeline_mode<synchronous>, transform_indices = @transform_16, window_bounds = array<i64: 128, 128>}, {pipeline_mode = #tpu.pipeline_mode<synchronous>, transform_indices = @transform_17, window_bounds = array<i64: 1, 128>}, {transform_indices = @transform_18, window_bounds = array<i64: 128, 128>}, {pipeline_mode = #tpu.pipeline_mode<synchronous>, transform_indices = @transform_19, window_bounds = array<i64: 16, 128>}]} {
    %c0_i32 = arith.constant 0 : i32
    %0 = arith.cmpi eq, %arg0, %c0_i32 : i32
    %1 = arith.extui %0 : i1 to i32
    %c0_i32_0 = arith.constant 0 : i32
    %2 = arith.cmpi ne, %1, %c0_i32_0 : i32
    scf.if %2 {
      %c0_38 = arith.constant 0 : index
      %c0_39 = arith.constant 0 : index
      %52 = vector.load %arg4[%c0_38, %c0_39] : memref<16x32xf32, #tpu.memory_space<vmem>>, vector<16x32xf32>
      %c0_40 = arith.constant 0 : index
      %c0_41 = arith.constant 0 : index
      %53 = vector.load %arg7[%c0_40, %c0_41] : memref<32x128xf32, #tpu.memory_space<vmem>>, vector<32x128xf32>
      %cst_42 = arith.constant dense<0.000000e+00> : vector<16x128xf32>
      %54 = tpu.matmul %52, %53, %cst_42 {dimension_numbers = #tpu.dot_dimension_numbers<[1], [0], [0], [1], [0, 0, 1, 1], [], []>} : vector<16x32xf32>, vector<32x128xf32>, vector<16x128xf32> -> vector<16x128xf32>
      %c0_43 = arith.constant 0 : index
      %c0_44 = arith.constant 0 : index
      %55 = vector.load %arg21[%c0_43, %c0_44] : memref<16x128xf32, #tpu.memory_space<vmem>>, vector<16x128xf32>
      tpu.vector_store %arg21[%c0_43, %c0_44], %54 {strides = array<i32>} : memref<16x128xf32, #tpu.memory_space<vmem>>, vector<16x128xf32>,
      %c0_45 = arith.constant 0 : index
      %c0_46 = arith.constant 0 : index
      %56 = vector.load %arg4[%c0_45, %c0_46] : memref<16x32xf32, #tpu.memory_space<vmem>>, vector<16x32xf32>
      %c0_47 = arith.constant 0 : index
      %c0_48 = arith.constant 0 : index
      %57 = vector.load %arg8[%c0_47, %c0_48] : memref<32x128xf32, #tpu.memory_space<vmem>>, vector<32x128xf32>
      %cst_49 = arith.constant dense<0.000000e+00> : vector<16x128xf32>
      %58 = tpu.matmul %56, %57, %cst_49 {dimension_numbers = #tpu.dot_dimension_numbers<[1], [0], [0], [1], [0, 0, 1, 1], [], []>} : vector<16x32xf32>, vector<32x128xf32>, vector<16x128xf32> -> vector<16x128xf32>
      %c0_50 = arith.constant 0 : index
      %c0_51 = arith.constant 0 : index
      %59 = vector.load %arg22[%c0_50, %c0_51] : memref<16x128xf32, #tpu.memory_space<vmem>>, vector<16x128xf32>
      tpu.vector_store %arg22[%c0_50, %c0_51], %58 {strides = array<i32>} : memref<16x128xf32, #tpu.memory_space<vmem>>, vector<16x128xf32>,
      %cst_52 = arith.constant 0.000000e+00 : f32
      %60 = vector.broadcast %cst_52 : f32 to vector<16x128xf32>
      %c0_53 = arith.constant 0 : index
      %c0_54 = arith.constant 0 : index
      %61 = vector.load %arg23[%c0_53, %c0_54] : memref<16x128xf32, #tpu.memory_space<vmem>>, vector<16x128xf32>
      tpu.vector_store %arg23[%c0_53, %c0_54], %60 {strides = array<i32>} : memref<16x128xf32, #tpu.memory_space<vmem>>, vector<16x128xf32>,
      %cst_55 = arith.constant 0.000000e+00 : f32
      %62 = vector.broadcast %cst_55 : f32 to vector<16x1xf32>
      %c0_56 = arith.constant 0 : index
      %c0_57 = arith.constant 0 : index
      %63 = vector.load %arg24[%c0_56, %c0_57] : memref<16x1xf32, #tpu.memory_space<vmem>>, vector<16x1xf32>
      tpu.vector_store %arg24[%c0_56, %c0_57], %62 {strides = array<i32>} : memref<16x1xf32, #tpu.memory_space<vmem>>, vector<16x1xf32>,
    } else {
    }
    %3 = tpu.iota {dimensions = array<i32: 1>} : vector<128x16xi32>
    %c0 = arith.constant 0 : index
    %c0_1 = arith.constant 0 : index
    %4 = vector.load %arg1[%c0, %c0_1] : memref<128x1xi32, #tpu.memory_space<vmem>>, vector<128x1xi32>
    %5 = vector.broadcast %4 : vector<128x1xi32> to vector<128x16xi32>
    %6 = arith.cmpi eq, %5, %3 : vector<128x16xi32>
    %7 = arith.extui %6 : vector<128x16xi1> to vector<128x16xi32>
    %8 = arith.sitofp %7 : vector<128x16xi32> to vector<128x16xf32>
    %c0_2 = arith.constant 0 : index
    %c0_3 = arith.constant 0 : index
    %9 = vector.load %arg2[%c0_2, %c0_3] : memref<128x1xi32, #tpu.memory_space<vmem>>, vector<128x1xi32>
    %10 = vector.broadcast %9 : vector<128x1xi32> to vector<128x16xi32>
    %11 = arith.cmpi eq, %10, %3 : vector<128x16xi32>
    %12 = arith.extui %11 : vector<128x16xi1> to vector<128x16xi32>
    %13 = arith.sitofp %12 : vector<128x16xi32> to vector<128x16xf32>
    %c0_4 = arith.constant 0 : index
    %c0_5 = arith.constant 0 : index
    %14 = vector.load %arg21[%c0_4, %c0_5] : memref<16x128xf32, #tpu.memory_space<vmem>>, vector<16x128xf32>
    %cst = arith.constant dense<0.000000e+00> : vector<128x128xf32>
    %15 = tpu.matmul %8, %14, %cst {dimension_numbers = #tpu.dot_dimension_numbers<[1], [0], [0], [1], [0, 0, 1, 1], [], []>} : vector<128x16xf32>, vector<16x128xf32>, vector<128x128xf32> -> vector<128x128xf32>
    %c0_6 = arith.constant 0 : index
    %c0_7 = arith.constant 0 : index
    %16 = vector.load %arg22[%c0_6, %c0_7] : memref<16x128xf32, #tpu.memory_space<vmem>>, vector<16x128xf32>
    %cst_8 = arith.constant dense<0.000000e+00> : vector<128x128xf32>
    %17 = tpu.matmul %13, %16, %cst_8 {dimension_numbers = #tpu.dot_dimension_numbers<[1], [0], [0], [1], [0, 0, 1, 1], [], []>} : vector<128x16xf32>, vector<16x128xf32>, vector<128x128xf32> -> vector<128x128xf32>
    %18 = arith.addf %15, %17 : vector<128x128xf32>
    %c0_9 = arith.constant 0 : index
    %c0_10 = arith.constant 0 : index
    %19 = vector.load %arg6[%c0_9, %c0_10] : memref<128x16xf32, #tpu.memory_space<vmem>>, vector<128x16xf32>
    %c0_11 = arith.constant 0 : index
    %c0_12 = arith.constant 0 : index
    %20 = vector.load %arg9[%c0_11, %c0_12] : memref<16x128xf32, #tpu.memory_space<vmem>>, vector<16x128xf32>
    %cst_13 = arith.constant dense<0.000000e+00> : vector<128x128xf32>
    %21 = tpu.matmul %19, %20, %cst_13 {dimension_numbers = #tpu.dot_dimension_numbers<[1], [0], [0], [1], [0, 0, 1, 1], [], []>} : vector<128x16xf32>, vector<16x128xf32>, vector<128x128xf32> -> vector<128x128xf32>
    %22 = arith.addf %18, %21 : vector<128x128xf32>
    %c0_14 = arith.constant 0 : index
    %c0_15 = arith.constant 0 : index
    %23 = vector.load %arg10[%c0_14, %c0_15] : memref<1x128xf32, #tpu.memory_space<vmem>>, vector<1x128xf32>
    %24 = vector.broadcast %23 : vector<1x128xf32> to vector<128x128xf32>
    %25 = arith.addf %22, %24 : vector<128x128xf32>
    %cst_16 = arith.constant 0.000000e+00 : f32
    %26 = vector.broadcast %cst_16 : f32 to vector<128x128xf32>
    %27 = arith.maximumf %25, %26 : vector<128x128xf32>
    %c0_17 = arith.constant 0 : index
    %c0_18 = arith.constant 0 : index
    %28 = vector.load %arg11[%c0_17, %c0_18] : memref<128x128xf32, #tpu.memory_space<vmem>>, vector<128x128xf32>
    %cst_19 = arith.constant dense<0.000000e+00> : vector<128x128xf32>
    %29 = tpu.matmul %27, %28, %cst_19 {dimension_numbers = #tpu.dot_dimension_numbers<[1], [0], [0], [1], [0, 0, 1, 1], [], []>} : vector<128x128xf32>, vector<128x128xf32>, vector<128x128xf32> -> vector<128x128xf32>
    %c0_20 = arith.constant 0 : index
    %c0_21 = arith.constant 0 : index
    %30 = vector.load %arg12[%c0_20, %c0_21] : memref<1x128xf32, #tpu.memory_space<vmem>>, vector<1x128xf32>
    %31 = vector.broadcast %30 : vector<1x128xf32> to vector<128x128xf32>
    %32 = arith.addf %29, %31 : vector<128x128xf32>
    %c0_22 = arith.constant 0 : index
    %c0_23 = arith.constant 0 : index
    %33 = vector.load %arg19[%c0_22, %c0_23] : memref<128x128xf32, #tpu.memory_space<vmem>>, vector<128x128xf32>
    tpu.vector_store %arg19[%c0_22, %c0_23], %32 {strides = array<i32>} : memref<128x128xf32, #tpu.memory_space<vmem>>, vector<128x128xf32>,
    %34 = tpu.iota {dimensions = array<i32: 0>} : vector<16x128xi32>
    %c0_24 = arith.constant 0 : index
    %c0_25 = arith.constant 0 : index
    %35 = vector.load %arg3[%c0_24, %c0_25] : memref<1x128xi32, #tpu.memory_space<vmem>>, vector<1x128xi32>
    %36 = vector.broadcast %35 : vector<1x128xi32> to vector<16x128xi32>
    %37 = arith.cmpi eq, %36, %34 : vector<16x128xi32>
    %38 = arith.extui %37 : vector<16x128xi1> to vector<16x128xi32>
    %39 = arith.sitofp %38 : vector<16x128xi32> to vector<16x128xf32>
    %c0_26 = arith.constant 0 : index
    %c0_27 = arith.constant 0 : index
    %40 = vector.load %arg23[%c0_26, %c0_27] : memref<16x128xf32, #tpu.memory_space<vmem>>, vector<16x128xf32>
    %cst_28 = arith.constant dense<0.000000e+00> : vector<16x128xf32>
    %41 = tpu.matmul %39, %32, %cst_28 {dimension_numbers = #tpu.dot_dimension_numbers<[1], [0], [0], [1], [0, 0, 1, 1], [], []>} : vector<16x128xf32>, vector<128x128xf32>, vector<16x128xf32> -> vector<16x128xf32>
    %42 = arith.addf %40, %41 : vector<16x128xf32>
    %c0_29 = arith.constant 0 : index
    %c0_30 = arith.constant 0 : index
    %43 = vector.load %arg23[%c0_29, %c0_30] : memref<16x128xf32, #tpu.memory_space<vmem>>, vector<16x128xf32>
    tpu.vector_store %arg23[%c0_29, %c0_30], %42 {strides = array<i32>} : memref<16x128xf32, #tpu.memory_space<vmem>>, vector<16x128xf32>,
    %c0_31 = arith.constant 0 : index
    %c0_32 = arith.constant 0 : index
    %44 = vector.load %arg24[%c0_31, %c0_32] : memref<16x1xf32, #tpu.memory_space<vmem>>, vector<16x1xf32>
    %cst_33 = arith.constant 1.000000e+00 : f32
    %45 = vector.broadcast %cst_33 : f32 to vector<128x1xf32>
    %cst_34 = arith.constant dense<0.000000e+00> : vector<16x1xf32>
    %46 = tpu.matmul %39, %45, %cst_34 {dimension_numbers = #tpu.dot_dimension_numbers<[1], [0], [0], [1], [0, 0, 1, 1], [], []>} : vector<16x128xf32>, vector<128x1xf32>, vector<16x1xf32> -> vector<16x1xf32>
    %47 = arith.addf %44, %46 : vector<16x1xf32>
    %c0_35 = arith.constant 0 : index
    %c0_36 = arith.constant 0 : index
    %48 = vector.load %arg24[%c0_35, %c0_36] : memref<16x1xf32, #tpu.memory_space<vmem>>, vector<16x1xf32>
    tpu.vector_store %arg24[%c0_35, %c0_36], %47 {strides = array<i32>} : memref<16x1xf32, #tpu.memory_space<vmem>>, vector<16x1xf32>,
    %c1_i32 = arith.constant 1 : i32
    %49 = arith.cmpi eq, %arg0, %c1_i32 : i32
    %50 = arith.extui %49 : i1 to i32
    %c0_i32_37 = arith.constant 0 : i32
    %51 = arith.cmpi ne, %50, %c0_i32_37 : i32
    scf.if %51 {
      %c0_38 = arith.constant 0 : index
      %c0_39 = arith.constant 0 : index
      %52 = vector.load %arg24[%c0_38, %c0_39] : memref<16x1xf32, #tpu.memory_space<vmem>>, vector<16x1xf32>
      %cst_40 = arith.constant 0.000000e+00 : f32
      %53 = vector.broadcast %cst_40 : f32 to vector<16x1xf32>
      %54 = arith.cmpf ogt, %52, %53 : vector<16x1xf32>
      %c0_41 = arith.constant 0 : index
      %c0_42 = arith.constant 0 : index
      %55 = vector.load %arg23[%c0_41, %c0_42] : memref<16x128xf32, #tpu.memory_space<vmem>>, vector<16x128xf32>
      %cst_43 = arith.constant 1.000000e+00 : f32
      %56 = vector.broadcast %cst_43 : f32 to vector<16x1xf32>
      %57 = arith.maximumf %52, %56 : vector<16x1xf32>
      %58 = vector.broadcast %57 : vector<16x1xf32> to vector<16x128xf32>
      %59 = arith.divf %55, %58 : vector<16x128xf32>
      %cst_44 = arith.constant 0.000000e+00 : f32
      %60 = vector.shape_cast %54 : vector<16x1xi1> to vector<16x1xi1>
      %61 = vector.broadcast %60 : vector<16x1xi1> to vector<16x128xi1>
      %62 = vector.broadcast %cst_44 : f32 to vector<16x128xf32>
      %63 = arith.select %61, %59, %62 : vector<16x128xi1>, vector<16x128xf32>
      %c0_45 = arith.constant 0 : index
      %c0_46 = arith.constant 0 : index
      %64 = vector.load %arg4[%c0_45, %c0_46] : memref<16x32xf32, #tpu.memory_space<vmem>>, vector<16x32xf32>
      %c0_47 = arith.constant 0 : index
      %c0_48 = arith.constant 0 : index
      %65 = vector.load %arg13[%c0_47, %c0_48] : memref<32x128xf32, #tpu.memory_space<vmem>>, vector<32x128xf32>
      %cst_49 = arith.constant dense<0.000000e+00> : vector<16x128xf32>
      %66 = tpu.matmul %64, %65, %cst_49 {dimension_numbers = #tpu.dot_dimension_numbers<[1], [0], [0], [1], [0, 0, 1, 1], [], []>} : vector<16x32xf32>, vector<32x128xf32>, vector<16x128xf32> -> vector<16x128xf32>
      %c0_50 = arith.constant 0 : index
      %c0_51 = arith.constant 0 : index
      %67 = vector.load %arg14[%c0_50, %c0_51] : memref<128x128xf32, #tpu.memory_space<vmem>>, vector<128x128xf32>
      %cst_52 = arith.constant dense<0.000000e+00> : vector<16x128xf32>
      %68 = tpu.matmul %63, %67, %cst_52 {dimension_numbers = #tpu.dot_dimension_numbers<[1], [0], [0], [1], [0, 0, 1, 1], [], []>} : vector<16x128xf32>, vector<128x128xf32>, vector<16x128xf32> -> vector<16x128xf32>
      %69 = arith.addf %66, %68 : vector<16x128xf32>
      %c0_53 = arith.constant 0 : index
      %c0_54 = arith.constant 0 : index
      %70 = vector.load %arg5[%c0_53, %c0_54] : memref<16x8xf32, #tpu.memory_space<vmem>>, vector<16x8xf32>
      %c0_55 = arith.constant 0 : index
      %c0_56 = arith.constant 0 : index
      %71 = vector.load %arg15[%c0_55, %c0_56] : memref<8x128xf32, #tpu.memory_space<vmem>>, vector<8x128xf32>
      %cst_57 = arith.constant dense<0.000000e+00> : vector<16x128xf32>
      %72 = tpu.matmul %70, %71, %cst_57 {dimension_numbers = #tpu.dot_dimension_numbers<[1], [0], [0], [1], [0, 0, 1, 1], [], []>} : vector<16x8xf32>, vector<8x128xf32>, vector<16x128xf32> -> vector<16x128xf32>
      %73 = arith.addf %69, %72 : vector<16x128xf32>
      %c0_58 = arith.constant 0 : index
      %c0_59 = arith.constant 0 : index
      %74 = vector.load %arg16[%c0_58, %c0_59] : memref<1x128xf32, #tpu.memory_space<vmem>>, vector<1x128xf32>
      %75 = vector.broadcast %74 : vector<1x128xf32> to vector<16x128xf32>
      %76 = arith.addf %73, %75 : vector<16x128xf32>
      %cst_60 = arith.constant 0.000000e+00 : f32
      %77 = vector.broadcast %cst_60 : f32 to vector<16x128xf32>
      %78 = arith.maximumf %76, %77 : vector<16x128xf32>
      %c0_61 = arith.constant 0 : index
      %c0_62 = arith.constant 0 : index
      %79 = vector.load %arg17[%c0_61, %c0_62] : memref<128x128xf32, #tpu.memory_space<vmem>>, vector<128x128xf32>
      %cst_63 = arith.constant dense<0.000000e+00> : vector<16x128xf32>
      %80 = tpu.matmul %78, %79, %cst_63 {dimension_numbers = #tpu.dot_dimension_numbers<[1], [0], [0], [1], [0, 0, 1, 1], [], []>} : vector<16x128xf32>, vector<128x128xf32>, vector<16x128xf32> -> vector<16x128xf32>
      %c0_64 = arith.constant 0 : index
      %c0_65 = arith.constant 0 : index
      %81 = vector.load %arg18[%c0_64, %c0_65] : memref<1x128xf32, #tpu.memory_space<vmem>>, vector<1x128xf32>
      %82 = vector.broadcast %81 : vector<1x128xf32> to vector<16x128xf32>
      %83 = arith.addf %80, %82 : vector<16x128xf32>
      %c0_66 = arith.constant 0 : index
      %c0_67 = arith.constant 0 : index
      %84 = vector.load %arg20[%c0_66, %c0_67] : memref<16x128xf32, #tpu.memory_space<vmem>>, vector<16x128xf32>
      tpu.vector_store %arg20[%c0_66, %c0_67], %83 {strides = array<i32>} : memref<16x128xf32, #tpu.memory_space<vmem>>, vector<16x128xf32>,
    } else {
    }
    return
  }
  func.func @transform_0(%arg0: i32) -> (i32, i32) {
    %c0_i32 = arith.constant 0 : i32
    %c0_i32_0 = arith.constant 0 : i32
    return %arg0, %c0_i32 : i32, i32
  }
  func.func @transform_1(%arg0: i32) -> (i32, i32) {
    %c0_i32 = arith.constant 0 : i32
    %c0_i32_0 = arith.constant 0 : i32
    return %arg0, %c0_i32 : i32, i32
  }
  func.func @transform_2(%arg0: i32) -> (i32, i32) {
    %c0_i32 = arith.constant 0 : i32
    %c0_i32_0 = arith.constant 0 : i32
    return %c0_i32, %arg0 : i32, i32
  }
  func.func @transform_3(%arg0: i32) -> (i32, i32) {
    %c0_i32 = arith.constant 0 : i32
    %c0_i32_0 = arith.constant 0 : i32
    %c0_i32_1 = arith.constant 0 : i32
    return %c0_i32, %c0_i32_0 : i32, i32
  }
  func.func @transform_4(%arg0: i32) -> (i32, i32) {
    %c0_i32 = arith.constant 0 : i32
    %c0_i32_0 = arith.constant 0 : i32
    %c0_i32_1 = arith.constant 0 : i32
    return %c0_i32, %c0_i32_0 : i32, i32
  }
  func.func @transform_5(%arg0: i32) -> (i32, i32) {
    %c0_i32 = arith.constant 0 : i32
    %c0_i32_0 = arith.constant 0 : i32
    return %arg0, %c0_i32 : i32, i32
  }
  func.func @transform_6(%arg0: i32) -> (i32, i32) {
    %c0_i32 = arith.constant 0 : i32
    %c0_i32_0 = arith.constant 0 : i32
    %c0_i32_1 = arith.constant 0 : i32
    return %c0_i32, %c0_i32_0 : i32, i32
  }
  func.func @transform_7(%arg0: i32) -> (i32, i32) {
    %c0_i32 = arith.constant 0 : i32
    %c0_i32_0 = arith.constant 0 : i32
    %c0_i32_1 = arith.constant 0 : i32
    return %c0_i32, %c0_i32_0 : i32, i32
  }
  func.func @transform_8(%arg0: i32) -> (i32, i32) {
    %c0_i32 = arith.constant 0 : i32
    %c0_i32_0 = arith.constant 0 : i32
    %c0_i32_1 = arith.constant 0 : i32
    return %c0_i32, %c0_i32_0 : i32, i32
  }
  func.func @transform_9(%arg0: i32) -> (i32, i32) {
    %c0_i32 = arith.constant 0 : i32
    %c0_i32_0 = arith.constant 0 : i32
    %c0_i32_1 = arith.constant 0 : i32
    return %c0_i32, %c0_i32_0 : i32, i32
  }
  func.func @transform_10(%arg0: i32) -> (i32, i32) {
    %c0_i32 = arith.constant 0 : i32
    %c0_i32_0 = arith.constant 0 : i32
    %c0_i32_1 = arith.constant 0 : i32
    return %c0_i32, %c0_i32_0 : i32, i32
  }
  func.func @transform_11(%arg0: i32) -> (i32, i32) {
    %c0_i32 = arith.constant 0 : i32
    %c0_i32_0 = arith.constant 0 : i32
    %c0_i32_1 = arith.constant 0 : i32
    return %c0_i32, %c0_i32_0 : i32, i32
  }
  func.func @transform_12(%arg0: i32) -> (i32, i32) {
    %c0_i32 = arith.constant 0 : i32
    %c0_i32_0 = arith.constant 0 : i32
    %c0_i32_1 = arith.constant 0 : i32
    return %c0_i32, %c0_i32_0 : i32, i32
  }
  func.func @transform_13(%arg0: i32) -> (i32, i32) {
    %c0_i32 = arith.constant 0 : i32
    %c0_i32_0 = arith.constant 0 : i32
    %c0_i32_1 = arith.constant 0 : i32
    return %c0_i32, %c0_i32_0 : i32, i32
  }
  func.func @transform_14(%arg0: i32) -> (i32, i32) {
    %c0_i32 = arith.constant 0 : i32
    %c0_i32_0 = arith.constant 0 : i32
    %c0_i32_1 = arith.constant 0 : i32
    return %c0_i32, %c0_i32_0 : i32, i32
  }
  func.func @transform_15(%arg0: i32) -> (i32, i32) {
    %c0_i32 = arith.constant 0 : i32
    %c0_i32_0 = arith.constant 0 : i32
    %c0_i32_1 = arith.constant 0 : i32
    return %c0_i32, %c0_i32_0 : i32, i32
  }
  func.func @transform_16(%arg0: i32) -> (i32, i32) {
    %c0_i32 = arith.constant 0 : i32
    %c0_i32_0 = arith.constant 0 : i32
    %c0_i32_1 = arith.constant 0 : i32
    return %c0_i32, %c0_i32_0 : i32, i32
  }
  func.func @transform_17(%arg0: i32) -> (i32, i32) {
    %c0_i32 = arith.constant 0 : i32
    %c0_i32_0 = arith.constant 0 : i32
    %c0_i32_1 = arith.constant 0 : i32
    return %c0_i32, %c0_i32_0 : i32, i32
  }
  func.func @transform_18(%arg0: i32) -> (i32, i32) {
    %c0_i32 = arith.constant 0 : i32
    %c0_i32_0 = arith.constant 0 : i32
    return %arg0, %c0_i32 : i32, i32
  }
  func.func @transform_19(%arg0: i32) -> (i32, i32) {
    %c0_i32 = arith.constant 0 : i32
    %c0_i32_0 = arith.constant 0 : i32
    %c0_i32_1 = arith.constant 0 : i32
    return %c0_i32, %c0_i32_0 : i32, i32
  }
}

</mosaic_0001>

<llo_original>
// kernel: tpu_custom_call.1
$region0: #{tpu_custom_call.1}
  #allocation0 [shape = 'u32[]', space=smem, size = 0x4, offset = 0x4, fixed_abs, tag = 'smem constant byte address 0x4 - core index']
  #allocation1 [shape = 'u32[144,128]{1,0:T(1,128)}', space=vmem, size = 0x12000, scoped, tag = 'internal scratch']
  #allocation2 [shape = 'f32[16,128]{1,0:T(8,128)}', space=vmem, size = 0x2000, scoped, tag = 'scratch operand']
  #allocation3 [shape = 'f32[16,128]{1,0:T(8,128)}', space=vmem, size = 0x2000, scoped, tag = 'scratch operand']
  #allocation4 [shape = 'f32[16,128]{1,0:T(8,128)}', space=vmem, size = 0x2000, scoped, tag = 'scratch operand']
  #allocation5 [shape = 'f32[16,1]{1,0:T(8,128)}', space=vmem, size = 0x2000, scoped, tag = 'scratch operand']
  %s0 = inlined_call_operand.vmem [shape: s32[256,1], index: 0, kind: input, shape index: {}]
  %s1 = inlined_call_operand.vmem [shape: s32[256,1], index: 1, kind: input, shape index: {}]
  %s2 = inlined_call_operand.vmem [shape: s32[1,256], index: 2, kind: input, shape index: {}]
  %s3 = inlined_call_operand.vmem [shape: f32[16,32], index: 3, kind: input, shape index: {}]
  %s4 = inlined_call_operand.vmem [shape: f32[16,8], index: 4, kind: input, shape index: {}]
  %s5 = inlined_call_operand.vmem [shape: f32[256,16], index: 5, kind: input, shape index: {}]
  %s6 = inlined_call_operand.vmem [shape: f32[32,128], index: 6, kind: input, shape index: {}]
  %s7 = inlined_call_operand.vmem [shape: f32[32,128], index: 7, kind: input, shape index: {}]
  %s8 = inlined_call_operand.vmem [shape: f32[16,128], index: 8, kind: input, shape index: {}]
  %s9 = inlined_call_operand.vmem [shape: f32[1,128], index: 9, kind: input, shape index: {}]
  %s10 = inlined_call_operand.vmem [shape: f32[128,128], index: 10, kind: input, shape index: {}]
  %s11 = inlined_call_operand.vmem [shape: f32[1,128], index: 11, kind: input, shape index: {}]
  %s12 = inlined_call_operand.vmem [shape: f32[32,128], index: 12, kind: input, shape index: {}]
  %s13 = inlined_call_operand.vmem [shape: f32[128,128], index: 13, kind: input, shape index: {}]
  %s14 = inlined_call_operand.vmem [shape: f32[8,128], index: 14, kind: input, shape index: {}]
  %s15 = inlined_call_operand.vmem [shape: f32[1,128], index: 15, kind: input, shape index: {}]
  %s16 = inlined_call_operand.vmem [shape: f32[128,128], index: 16, kind: input, shape index: {}]
  %s17 = inlined_call_operand.vmem [shape: f32[1,128], index: 17, kind: input, shape index: {}]
  %s18 = inlined_call_operand.hbm [shape: f32[256,128], index: 18, kind: output, shape index: {0}]
  %s19 = inlined_call_operand.hbm [shape: f32[16,128], index: 19, kind: output, shape index: {1}]
  %20 = xla_tuple %s18, %s19
  %s21 = sld [smem:[#allocation0]]
  $region121: #{tpu_custom_call.1} parent=0
    _
  %s23 = ssub.s32 1, %s21
  %s24 = scalar_select 0, %s23, %s21
  $region1: #{tpu_custom_call.1} parent=0
    #allocation6 [shape = 'u8[131072]{0}', space=vmem, size = 0x20000, scoped, tag = 'output window, operand 0']
    #allocation7 [shape = 's32[2]{0}', space=sflag, size = 0x8, scoped, tag = 'scoped memory for tpu_custom_call.1']
    #allocation8 [shape = 'u8[8192]{0}', space=vmem, size = 0x2000, scoped, tag = 'output window, operand 1, single buffered']
    #allocation9 [shape = 's32[1]{0}', space=sflag, size = 0x4, scoped, tag = 'scoped memory for tpu_custom_call.1']
    %25 = vsyncpa [#allocation7], 0
    %s26 = scalar_lea.sflag [#allocation7], 1
    %27 = vsyncpa %s26, 0
    %28 = vsyncpa [#allocation9], 0
    loop: start=0, step=1, limit=4
    $region2: #{tpu_custom_call.1} parent=1 // loop_pre_header
      _
    $region3: #{tpu_custom_call.1} parent=1 // loop_header
      %s30 = sphi 0, %s34
      %p31 = scmp.ge.s32.totalorder %s30, 4
      %s40 = sphi 0, %s42
      %s43 = sphi 0, %s40
      %s44 = sphi 0, %s43
      %s60 = sphi 0, %s44
      %s66 = sphi 0, %s68
      %s69 = sphi 0, %s66
      %s70 = sphi 0, %s69
      %s86 = sphi 0, %s70
      %s92 = sphi 0, %s94
      %s95 = sphi 0, %s92
      %s96 = sphi 0, %s95
      %s112 = sphi 0, %s96
      %s116 = sphi 0, %s116
      %s118 = sphi 0, %s116
      %s119 = sphi 0, %s118
      %s133 = sphi 0, %s119
      %s137 = sphi 0, %s137
      %s139 = sphi 0, %s137
      %s140 = sphi 0, %s139
      %s154 = sphi 0, %s140
      %s160 = sphi 0, %s162
      %s163 = sphi 0, %s160
      %s164 = sphi 0, %s163
      %s180 = sphi 0, %s164
      %s184 = sphi 0, %s184
      %s186 = sphi 0, %s184
      %s187 = sphi 0, %s186
      %s201 = sphi 0, %s187
      %s205 = sphi 0, %s205
      %s207 = sphi 0, %s205
      %s208 = sphi 0, %s207
      %s222 = sphi 0, %s208
      %s226 = sphi 0, %s226
      %s228 = sphi 0, %s226
      %s229 = sphi 0, %s228
      %s243 = sphi 0, %s229
      %s247 = sphi 0, %s247
      %s249 = sphi 0, %s247
      %s250 = sphi 0, %s249
      %s264 = sphi 0, %s250
      %s268 = sphi 0, %s268
      %s270 = sphi 0, %s268
      %s271 = sphi 0, %s270
      %s285 = sphi 0, %s271
      %s289 = sphi 0, %s289
      %s291 = sphi 0, %s289
      %s292 = sphi 0, %s291
      %s306 = sphi 0, %s292
      %s310 = sphi 0, %s310
      %s312 = sphi 0, %s310
      %s313 = sphi 0, %s312
      %s327 = sphi 0, %s313
      %s331 = sphi 0, %s331
      %s333 = sphi 0, %s331
      %s334 = sphi 0, %s333
      %s348 = sphi 0, %s334
      %s352 = sphi 0, %s352
      %s354 = sphi 0, %s352
      %s355 = sphi 0, %s354
      %s369 = sphi 0, %s355
      %s373 = sphi 0, %s373
      %s375 = sphi 0, %s373
      %s376 = sphi 0, %s375
      %s390 = sphi 0, %s376
      %s394 = sphi 0, %s394
      %s396 = sphi 0, %s394
      %s397 = sphi 0, %s396
      %s411 = sphi 0, %s397
      %s415 = sphi 0, %s415
      %s417 = sphi 0, %s415
      %s418 = sphi 0, %s417
      %s432 = sphi 0, %s418
      %s438 = sphi 0, %s440
      %s441 = sphi 0, %s438
      %s442 = sphi 0, %s441
      %s458 = sphi 0, %s442
      %s462 = sphi 0, %s462
      %s464 = sphi 0, %s462
      %s465 = sphi 0, %s464
      %s479 = sphi 0, %s465
    $region4: #{tpu_custom_call.1} parent=1 // loop_header_branch
      %33 = sbr.rel (%p31) target = $region8
    $region5: #{tpu_custom_call.1} parent=1 // loop_body
      %s35 = ssub.s32 %s30, 1
      %s36 = ssub.s32 %s30, 2
      %s37 = sadd.s32 %s30, 1
      %s38 = ssub.s32 %s30, %s37
      %p39 = scmp.eq.s32.totalorder %s38, 0
      %s41 = sadd.s32 %s40, 1
      %s42 = scalar_select %p39, %s40, %s41
      %p45 = pneg %p39
      %p46 = scmp.eq.s32.totalorder %s30, 1
      %p47 = por %p45, %p46
      %p48 = scmp.ne.s32.totalorder %s40, %s43
      %p49 = scmp.eq.s32.totalorder %s30, 0
      %p50 = por %p48, %p49
      %p51 = scmp.ne.s32.totalorder %s40, %s43
      %p52 = scmp.eq.s32.totalorder %s35, 1
      %p53 = por %p51, %p52
      %p54 = scmp.ne.s32.totalorder %s43, %s44
      %p55 = scmp.eq.s32.totalorder %s35, 0
      %p56 = por %p54, %p55
      %p57 = scmp.ne.s32.totalorder %s43, %s44
      %p58 = scmp.eq.s32.totalorder %s36, 1
      %p59 = por %p57, %p58
      %p61 = scmp.ne.s32.totalorder %s44, %s60
      %p62 = scmp.eq.s32.totalorder %s36, 0
      %p63 = por %p61, %p62
      %s64 = ssub.s32 %s30, %s37
      %p65 = scmp.eq.s32.totalorder %s64, 0
      %s67 = sadd.s32 %s66, 1
      %s68 = scalar_select %p65, %s66, %s67
      %p71 = pneg %p65
      %p72 = scmp.eq.s32.totalorder %s30, 1
      %p73 = por %p71, %p72
      %p74 = scmp.ne.s32.totalorder %s66, %s69
      %p75 = scmp.eq.s32.totalorder %s30, 0
      %p76 = por %p74, %p75
      %p77 = scmp.ne.s32.totalorder %s66, %s69
      %p78 = scmp.eq.s32.totalorder %s35, 1
      %p79 = por %p77, %p78
      %p80 = scmp.ne.s32.totalorder %s69, %s70
      %p81 = scmp.eq.s32.totalorder %s35, 0
      %p82 = por %p80, %p81
      %p83 = scmp.ne.s32.totalorder %s69, %s70
      %p84 = scmp.eq.s32.totalorder %s36, 1
      %p85 = por %p83, %p84
      %p87 = scmp.ne.s32.totalorder %s70, %s86
      %p88 = scmp.eq.s32.totalorder %s36, 0
      %p89 = por %p87, %p88
      %s90 = ssub.s32 %s30, %s37
      %p91 = scmp.eq.s32.totalorder %s90, 0
      %s93 = sadd.s32 %s92, 1
      %s94 = scalar_select %p91, %s92, %s93
      %p97 = pneg %p91
      %p98 = scmp.eq.s32.totalorder %s30, 1
      %p99 = por %p97, %p98
      %p100 = scmp.ne.s32.totalorder %s92, %s95
      %p101 = scmp.eq.s32.totalorder %s30, 0
      %p102 = por %p100, %p101
      %p103 = scmp.ne.s32.totalorder %s92, %s95
      %p104 = scmp.eq.s32.totalorder %s35, 1
      %p105 = por %p103, %p104
      %p106 = scmp.ne.s32.totalorder %s95, %s96
      %p107 = scmp.eq.s32.totalorder %s35, 0
      %p108 = por %p106, %p107
      %p109 = scmp.ne.s32.totalorder %s95, %s96
      %p110 = scmp.eq.s32.totalorder %s36, 1
      %p111 = por %p109, %p110
      %p113 = scmp.ne.s32.totalorder %s96, %s112
      %p114 = scmp.eq.s32.totalorder %s36, 0
      %p115 = por %p113, %p114
      %s117 = sadd.s32 %s116, 1
      %p120 = scmp.eq.s32.totalorder %s30, 1
      %p121 = scmp.ne.s32.totalorder %s116, %s118
      %p122 = scmp.eq.s32.totalorder %s30, 0
      %p123 = por %p121, %p122
      %p124 = scmp.ne.s32.totalorder %s116, %s118
      %p125 = scmp.eq.s32.totalorder %s35, 1
      %p126 = por %p124, %p125
      %p127 = scmp.ne.s32.totalorder %s118, %s119
      %p128 = scmp.eq.s32.totalorder %s35, 0
      %p129 = por %p127, %p128
      %p130 = scmp.ne.s32.totalorder %s118, %s119
      %p131 = scmp.eq.s32.totalorder %s36, 1
      %p132 = por %p130, %p131
      %p134 = scmp.ne.s32.totalorder %s119, %s133
      %p135 = scmp.eq.s32.totalorder %s36, 0
      %p136 = por %p134, %p135
      %s138 = sadd.s32 %s137, 1
      %p141 = scmp.eq.s32.totalorder %s30, 1
      %p142 = scmp.ne.s32.totalorder %s137, %s139
      %p143 = scmp.eq.s32.totalorder %s30, 0
      %p144 = por %p142, %p143
      %p145 = scmp.ne.s32.totalorder %s137, %s139
      %p146 = scmp.eq.s32.totalorder %s35, 1
      %p147 = por %p145, %p146
      %p148 = scmp.ne.s32.totalorder %s139, %s140
      %p149 = scmp.eq.s32.totalorder %s35, 0
      %p150 = por %p148, %p149
      %p151 = scmp.ne.s32.totalorder %s139, %s140
      %p152 = scmp.eq.s32.totalorder %s36, 1
      %p153 = por %p151, %p152
      %p155 = scmp.ne.s32.totalorder %s140, %s154
      %p156 = scmp.eq.s32.totalorder %s36, 0
      %p157 = por %p155, %p156
      %s158 = ssub.s32 %s30, %s37
      %p159 = scmp.eq.s32.totalorder %s158, 0
      %s161 = sadd.s32 %s160, 1
      %s162 = scalar_select %p159, %s160, %s161
      %p165 = pneg %p159
      %p166 = scmp.eq.s32.totalorder %s30, 1
      %p167 = por %p165, %p166
      %p168 = scmp.ne.s32.totalorder %s160, %s163
      %p169 = scmp.eq.s32.totalorder %s30, 0
      %p170 = por %p168, %p169
      %p171 = scmp.ne.s32.totalorder %s160, %s163
      %p172 = scmp.eq.s32.totalorder %s35, 1
      %p173 = por %p171, %p172
      %p174 = scmp.ne.s32.totalorder %s163, %s164
      %p175 = scmp.eq.s32.totalorder %s35, 0
      %p176 = por %p174, %p175
      %p177 = scmp.ne.s32.totalorder %s163, %s164
      %p178 = scmp.eq.s32.totalorder %s36, 1
      %p179 = por %p177, %p178
      %p181 = scmp.ne.s32.totalorder %s164, %s180
      %p182 = scmp.eq.s32.totalorder %s36, 0
      %p183 = por %p181, %p182
      %s185 = sadd.s32 %s184, 1
      %p188 = scmp.eq.s32.totalorder %s30, 1
      %p189 = scmp.ne.s32.totalorder %s184, %s186
      %p190 = scmp.eq.s32.totalorder %s30, 0
      %p191 = por %p189, %p190
      %p192 = scmp.ne.s32.totalorder %s184, %s186
      %p193 = scmp.eq.s32.totalorder %s35, 1
      %p194 = por %p192, %p193
      %p195 = scmp.ne.s32.totalorder %s186, %s187
      %p196 = scmp.eq.s32.totalorder %s35, 0
      %p197 = por %p195, %p196
      %p198 = scmp.ne.s32.totalorder %s186, %s187
      %p199 = scmp.eq.s32.totalorder %s36, 1
      %p200 = por %p198, %p199
      %p202 = scmp.ne.s32.totalorder %s187, %s201
      %p203 = scmp.eq.s32.totalorder %s36, 0
      %p204 = por %p202, %p203
      %s206 = sadd.s32 %s205, 1
      %p209 = scmp.eq.s32.totalorder %s30, 1
      %p210 = scmp.ne.s32.totalorder %s205, %s207
      %p211 = scmp.eq.s32.totalorder %s30, 0
      %p212 = por %p210, %p211
      %p213 = scmp.ne.s32.totalorder %s205, %s207
      %p214 = scmp.eq.s32.totalorder %s35, 1
      %p215 = por %p213, %p214
      %p216 = scmp.ne.s32.totalorder %s207, %s208
      %p217 = scmp.eq.s32.totalorder %s35, 0
      %p218 = por %p216, %p217
      %p219 = scmp.ne.s32.totalorder %s207, %s208
      %p220 = scmp.eq.s32.totalorder %s36, 1
      %p221 = por %p219, %p220
      %p223 = scmp.ne.s32.totalorder %s208, %s222
      %p224 = scmp.eq.s32.totalorder %s36, 0
      %p225 = por %p223, %p224
      %s227 = sadd.s32 %s226, 1
      %p230 = scmp.eq.s32.totalorder %s30, 1
      %p231 = scmp.ne.s32.totalorder %s226, %s228
      %p232 = scmp.eq.s32.totalorder %s30, 0
      %p233 = por %p231, %p232
      %p234 = scmp.ne.s32.totalorder %s226, %s228
      %p235 = scmp.eq.s32.totalorder %s35, 1
      %p236 = por %p234, %p235
      %p237 = scmp.ne.s32.totalorder %s228, %s229
      %p238 = scmp.eq.s32.totalorder %s35, 0
      %p239 = por %p237, %p238
      %p240 = scmp.ne.s32.totalorder %s228, %s229
      %p241 = scmp.eq.s32.totalorder %s36, 1
      %p242 = por %p240, %p241
      %p244 = scmp.ne.s32.totalorder %s229, %s243
      %p245 = scmp.eq.s32.totalorder %s36, 0
      %p246 = por %p244, %p245
      %s248 = sadd.s32 %s247, 1
      %p251 = scmp.eq.s32.totalorder %s30, 1
      %p252 = scmp.ne.s32.totalorder %s247, %s249
      %p253 = scmp.eq.s32.totalorder %s30, 0
      %p254 = por %p252, %p253
      %p255 = scmp.ne.s32.totalorder %s247, %s249
      %p256 = scmp.eq.s32.totalorder %s35, 1
      %p257 = por %p255, %p256
      %p258 = scmp.ne.s32.totalorder %s249, %s250
      %p259 = scmp.eq.s32.totalorder %s35, 0
      %p260 = por %p258, %p259
      %p261 = scmp.ne.s32.totalorder %s249, %s250
      %p262 = scmp.eq.s32.totalorder %s36, 1
      %p263 = por %p261, %p262
      %p265 = scmp.ne.s32.totalorder %s250, %s264
      %p266 = scmp.eq.s32.totalorder %s36, 0
      %p267 = por %p265, %p266
      %s269 = sadd.s32 %s268, 1
      %p272 = scmp.eq.s32.totalorder %s30, 1
      %p273 = scmp.ne.s32.totalorder %s268, %s270
      %p274 = scmp.eq.s32.totalorder %s30, 0
      %p275 = por %p273, %p274
      %p276 = scmp.ne.s32.totalorder %s268, %s270
      %p277 = scmp.eq.s32.totalorder %s35, 1
      %p278 = por %p276, %p277
      %p279 = scmp.ne.s32.totalorder %s270, %s271
      %p280 = scmp.eq.s32.totalorder %s35, 0
      %p281 = por %p279, %p280
      %p282 = scmp.ne.s32.totalorder %s270, %s271
      %p283 = scmp.eq.s32.totalorder %s36, 1
      %p284 = por %p282, %p283
      %p286 = scmp.ne.s32.totalorder %s271, %s285
      %p287 = scmp.eq.s32.totalorder %s36, 0
      %p288 = por %p286, %p287
      %s290 = sadd.s32 %s289, 1
      %p293 = scmp.eq.s32.totalorder %s30, 1
      %p294 = scmp.ne.s32.totalorder %s289, %s291
      %p295 = scmp.eq.s32.totalorder %s30, 0
      %p296 = por %p294, %p295
      %p297 = scmp.ne.s32.totalorder %s289, %s291
      %p298 = scmp.eq.s32.totalorder %s35, 1
      %p299 = por %p297, %p298
      %p300 = scmp.ne.s32.totalorder %s291, %s292
      %p301 = scmp.eq.s32.totalorder %s35, 0
      %p302 = por %p300, %p301
      %p303 = scmp.ne.s32.totalorder %s291, %s292
      %p304 = scmp.eq.s32.totalorder %s36, 1
      %p305 = por %p303, %p304
      %p307 = scmp.ne.s32.totalorder %s292, %s306
      %p308 = scmp.eq.s32.totalorder %s36, 0
      %p309 = por %p307, %p308
      %s311 = sadd.s32 %s310, 1
      %p314 = scmp.eq.s32.totalorder %s30, 1
      %p315 = scmp.ne.s32.totalorder %s310, %s312
      %p316 = scmp.eq.s32.totalorder %s30, 0
      %p317 = por %p315, %p316
      %p318 = scmp.ne.s32.totalorder %s310, %s312
      %p319 = scmp.eq.s32.totalorder %s35, 1
      %p320 = por %p318, %p319
      %p321 = scmp.ne.s32.totalorder %s312, %s313
      %p322 = scmp.eq.s32.totalorder %s35, 0
      %p323 = por %p321, %p322
      %p324 = scmp.ne.s32.totalorder %s312, %s313
      %p325 = scmp.eq.s32.totalorder %s36, 1
      %p326 = por %p324, %p325
      %p328 = scmp.ne.s32.totalorder %s313, %s327
      %p329 = scmp.eq.s32.totalorder %s36, 0
      %p330 = por %p328, %p329
      %s332 = sadd.s32 %s331, 1
      %p335 = scmp.eq.s32.totalorder %s30, 1
      %p336 = scmp.ne.s32.totalorder %s331, %s333
      %p337 = scmp.eq.s32.totalorder %s30, 0
      %p338 = por %p336, %p337
      %p339 = scmp.ne.s32.totalorder %s331, %s333
      %p340 = scmp.eq.s32.totalorder %s35, 1
      %p341 = por %p339, %p340
      %p342 = scmp.ne.s32.totalorder %s333, %s334
      %p343 = scmp.eq.s32.totalorder %s35, 0
      %p344 = por %p342, %p343
      %p345 = scmp.ne.s32.totalorder %s333, %s334
      %p346 = scmp.eq.s32.totalorder %s36, 1
      %p347 = por %p345, %p346
      %p349 = scmp.ne.s32.totalorder %s334, %s348
      %p350 = scmp.eq.s32.totalorder %s36, 0
      %p351 = por %p349, %p350
      %s353 = sadd.s32 %s352, 1
      %p356 = scmp.eq.s32.totalorder %s30, 1
      %p357 = scmp.ne.s32.totalorder %s352, %s354
      %p358 = scmp.eq.s32.totalorder %s30, 0
      %p359 = por %p357, %p358
      %p360 = scmp.ne.s32.totalorder %s352, %s354
      %p361 = scmp.eq.s32.totalorder %s35, 1
      %p362 = por %p360, %p361
      %p363 = scmp.ne.s32.totalorder %s354, %s355
      %p364 = scmp.eq.s32.totalorder %s35, 0
      %p365 = por %p363, %p364
      %p366 = scmp.ne.s32.totalorder %s354, %s355
      %p367 = scmp.eq.s32.totalorder %s36, 1
      %p368 = por %p366, %p367
      %p370 = scmp.ne.s32.totalorder %s355, %s369
      %p371 = scmp.eq.s32.totalorder %s36, 0
      %p372 = por %p370, %p371
      %s374 = sadd.s32 %s373, 1
      %p377 = scmp.eq.s32.totalorder %s30, 1
      %p378 = scmp.ne.s32.totalorder %s373, %s375
      %p379 = scmp.eq.s32.totalorder %s30, 0
      %p380 = por %p378, %p379
      %p381 = scmp.ne.s32.totalorder %s373, %s375
      %p382 = scmp.eq.s32.totalorder %s35, 1
      %p383 = por %p381, %p382
      %p384 = scmp.ne.s32.totalorder %s375, %s376
      %p385 = scmp.eq.s32.totalorder %s35, 0
      %p386 = por %p384, %p385
      %p387 = scmp.ne.s32.totalorder %s375, %s376
      %p388 = scmp.eq.s32.totalorder %s36, 1
      %p389 = por %p387, %p388
      %p391 = scmp.ne.s32.totalorder %s376, %s390
      %p392 = scmp.eq.s32.totalorder %s36, 0
      %p393 = por %p391, %p392
      %s395 = sadd.s32 %s394, 1
      %p398 = scmp.eq.s32.totalorder %s30, 1
      %p399 = scmp.ne.s32.totalorder %s394, %s396
      %p400 = scmp.eq.s32.totalorder %s30, 0
      %p401 = por %p399, %p400
      %p402 = scmp.ne.s32.totalorder %s394, %s396
      %p403 = scmp.eq.s32.totalorder %s35, 1
      %p404 = por %p402, %p403
      %p405 = scmp.ne.s32.totalorder %s396, %s397
      %p406 = scmp.eq.s32.totalorder %s35, 0
      %p407 = por %p405, %p406
      %p408 = scmp.ne.s32.totalorder %s396, %s397
      %p409 = scmp.eq.s32.totalorder %s36, 1
      %p410 = por %p408, %p409
      %p412 = scmp.ne.s32.totalorder %s397, %s411
      %p413 = scmp.eq.s32.totalorder %s36, 0
      %p414 = por %p412, %p413
      %s416 = sadd.s32 %s415, 1
      %p419 = scmp.eq.s32.totalorder %s30, 1
      %p420 = scmp.ne.s32.totalorder %s415, %s417
      %p421 = scmp.eq.s32.totalorder %s30, 0
      %p422 = por %p420, %p421
      %p423 = scmp.ne.s32.totalorder %s415, %s417
      %p424 = scmp.eq.s32.totalorder %s35, 1
      %p425 = por %p423, %p424
      %p426 = scmp.ne.s32.totalorder %s417, %s418
      %p427 = scmp.eq.s32.totalorder %s35, 0
      %p428 = por %p426, %p427
      %p429 = scmp.ne.s32.totalorder %s417, %s418
      %p430 = scmp.eq.s32.totalorder %s36, 1
      %p431 = por %p429, %p430
      %p433 = scmp.ne.s32.totalorder %s418, %s432
      %p434 = scmp.eq.s32.totalorder %s36, 0
      %p435 = por %p433, %p434
      %s436 = ssub.s32 %s30, %s37
      %p437 = scmp.eq.s32.totalorder %s436, 0
      %s439 = sadd.s32 %s438, 1
      %s440 = scalar_select %p437, %s438, %s439
      %p443 = pneg %p437
      %p444 = scmp.eq.s32.totalorder %s30, 1
      %p445 = por %p443, %p444
      %p446 = scmp.ne.s32.totalorder %s438, %s441
      %p447 = scmp.eq.s32.totalorder %s30, 0
      %p448 = por %p446, %p447
      %p449 = scmp.ne.s32.totalorder %s438, %s441
      %p450 = scmp.eq.s32.totalorder %s35, 1
      %p451 = por %p449, %p450
      %p452 = scmp.ne.s32.totalorder %s441, %s442
      %p453 = scmp.eq.s32.totalorder %s35, 0
      %p454 = por %p452, %p453
      %p455 = scmp.ne.s32.totalorder %s441, %s442
      %p456 = scmp.eq.s32.totalorder %s36, 1
      %p457 = por %p455, %p456
      %p459 = scmp.ne.s32.totalorder %s442, %s458
      %p460 = scmp.eq.s32.totalorder %s36, 0
      %p461 = por %p459, %p460
      %s463 = sadd.s32 %s462, 1
      %p466 = scmp.eq.s32.totalorder %s30, 1
      %p467 = scmp.ne.s32.totalorder %s462, %s464
      %p468 = scmp.eq.s32.totalorder %s30, 0
      %p469 = por %p467, %p468
      %p470 = scmp.ne.s32.totalorder %s462, %s464
      %p471 = scmp.eq.s32.totalorder %s35, 1
      %p472 = por %p470, %p471
      %p473 = scmp.ne.s32.totalorder %s464, %s465
      %p474 = scmp.eq.s32.totalorder %s35, 0
      %p475 = por %p473, %p474
      %p476 = scmp.ne.s32.totalorder %s464, %s465
      %p477 = scmp.eq.s32.totalorder %s36, 1
      %p478 = por %p476, %p477
      %p480 = scmp.ne.s32.totalorder %s465, %s479
      %p481 = scmp.eq.s32.totalorder %s36, 0
      %p482 = por %p480, %p481
      %p483 = scmp.le.s32.totalorder 1, %s30
      %p484 = scmp.lt.s32.totalorder %s30, 3
      %p485 = pnand %p483, %p484
      %p486 = pneg %p485
      // Predicated region
      $region9: #{tpu_custom_call.1} parent=5 // pred_check
        _
      $region10: #{tpu_custom_call.1} parent=5 // pred_check_branch
        %488 = sbr.rel (%p485) target = $region12
      $region11: #{tpu_custom_call.1} parent=5 // pred_region
        %s489 = ssub.s32 %s30, 1
        // Predicated region
        $region13: #{tpu_custom_call.1} parent=11 // pred_check
          %p490 = pneg %p129
        $region14: #{tpu_custom_call.1} parent=11 // pred_check_branch
          %492 = sbr.rel (%p490) target = $region16
        $region15: #{tpu_custom_call.1} parent=11 // pred_region
          _
        $region16: #{tpu_custom_call.1} parent=11 // pred_fallthru
          _
        // Predicated region
        $region17: #{tpu_custom_call.1} parent=11 // pred_check
          %p493 = pneg %p150
        $region18: #{tpu_custom_call.1} parent=11 // pred_check_branch
          %495 = sbr.rel (%p493) target = $region20
        $region19: #{tpu_custom_call.1} parent=11 // pred_region
          _
        $region20: #{tpu_custom_call.1} parent=11 // pred_fallthru
          _
        // Predicated region
        $region21: #{tpu_custom_call.1} parent=11 // pred_check
          %p496 = pneg %p197
        $region22: #{tpu_custom_call.1} parent=11 // pred_check_branch
          %498 = sbr.rel (%p496) target = $region24
        $region23: #{tpu_custom_call.1} parent=11 // pred_region
          _
        $region24: #{tpu_custom_call.1} parent=11 // pred_fallthru
          _
        // Predicated region
        $region25: #{tpu_custom_call.1} parent=11 // pred_check
          %p499 = pneg %p218
        $region26: #{tpu_custom_call.1} parent=11 // pred_check_branch
          %501 = sbr.rel (%p499) target = $region28
        $region27: #{tpu_custom_call.1} parent=11 // pred_region
          _
        $region28: #{tpu_custom_call.1} parent=11 // pred_fallthru
          _
        // Predicated region
        $region29: #{tpu_custom_call.1} parent=11 // pred_check
          %p502 = pneg %p239
        $region30: #{tpu_custom_call.1} parent=11 // pred_check_branch
          %504 = sbr.rel (%p502) target = $region32
        $region31: #{tpu_custom_call.1} parent=11 // pred_region
          _
        $region32: #{tpu_custom_call.1} parent=11 // pred_fallthru
          _
        // Predicated region
        $region33: #{tpu_custom_call.1} parent=11 // pred_check
          %p505 = pneg %p260
        $region34: #{tpu_custom_call.1} parent=11 // pred_check_branch
          %507 = sbr.rel (%p505) target = $region36
        $region35: #{tpu_custom_call.1} parent=11 // pred_region
          _
        $region36: #{tpu_custom_call.1} parent=11 // pred_fallthru
          _
        // Predicated region
        $region37: #{tpu_custom_call.1} parent=11 // pred_check
          %p508 = pneg %p281
        $region38: #{tpu_custom_call.1} parent=11 // pred_check_branch
          %510 = sbr.rel (%p508) target = $region40
        $region39: #{tpu_custom_call.1} parent=11 // pred_region
          _
        $region40: #{tpu_custom_call.1} parent=11 // pred_fallthru
          _
        // Predicated region
        $region41: #{tpu_custom_call.1} parent=11 // pred_check
          %p511 = pneg %p302
        $region42: #{tpu_custom_call.1} parent=11 // pred_check_branch
          %513 = sbr.rel (%p511) target = $region44
        $region43: #{tpu_custom_call.1} parent=11 // pred_region
          _
        $region44: #{tpu_custom_call.1} parent=11 // pred_fallthru
          _
        // Predicated region
        $region45: #{tpu_custom_call.1} parent=11 // pred_check
          %p514 = pneg %p323
        $region46: #{tpu_custom_call.1} parent=11 // pred_check_branch
          %516 = sbr.rel (%p514) target = $region48
        $region47: #{tpu_custom_call.1} parent=11 // pred_region
          _
        $region48: #{tpu_custom_call.1} parent=11 // pred_fallthru
          _
        // Predicated region
        $region49: #{tpu_custom_call.1} parent=11 // pred_check
          %p517 = pneg %p344
        $region50: #{tpu_custom_call.1} parent=11 // pred_check_branch
          %519 = sbr.rel (%p517) target = $region52
        $region51: #{tpu_custom_call.1} parent=11 // pred_region
          _
        $region52: #{tpu_custom_call.1} parent=11 // pred_fallthru
          _
        // Predicated region
        $region53: #{tpu_custom_call.1} parent=11 // pred_check
          %p520 = pneg %p365
        $region54: #{tpu_custom_call.1} parent=11 // pred_check_branch
          %522 = sbr.rel (%p520) target = $region56
        $region55: #{tpu_custom_call.1} parent=11 // pred_region
          _
        $region56: #{tpu_custom_call.1} parent=11 // pred_fallthru
          _
        // Predicated region
        $region57: #{tpu_custom_call.1} parent=11 // pred_check
          %p523 = pneg %p386
        $region58: #{tpu_custom_call.1} parent=11 // pred_check_branch
          %525 = sbr.rel (%p523) target = $region60
        $region59: #{tpu_custom_call.1} parent=11 // pred_region
          _
        $region60: #{tpu_custom_call.1} parent=11 // pred_fallthru
          _
        // Predicated region
        $region61: #{tpu_custom_call.1} parent=11 // pred_check
          %p526 = pneg %p407
        $region62: #{tpu_custom_call.1} parent=11 // pred_check_branch
          %528 = sbr.rel (%p526) target = $region64
        $region63: #{tpu_custom_call.1} parent=11 // pred_region
          _
        $region64: #{tpu_custom_call.1} parent=11 // pred_fallthru
          _
        // Predicated region
        $region65: #{tpu_custom_call.1} parent=11 // pred_check
          %p529 = pneg %p428
        $region66: #{tpu_custom_call.1} parent=11 // pred_check_branch
          %531 = sbr.rel (%p529) target = $region68
        $region67: #{tpu_custom_call.1} parent=11 // pred_region
          _
        $region68: #{tpu_custom_call.1} parent=11 // pred_fallthru
          _
      $region12: #{tpu_custom_call.1} parent=5 // pred_fallthru
        _
      %p532 = scmp.lt.s32.totalorder %s30, 2
      // Predicated region
      $region69: #{tpu_custom_call.1} parent=5 // pred_check
        %p533 = pneg %p532
      $region70: #{tpu_custom_call.1} parent=5 // pred_check_branch
        %535 = sbr.rel (%p533) target = $region72
      $region71: #{tpu_custom_call.1} parent=5 // pred_region
        // Predicated region
        $region73: #{tpu_custom_call.1} parent=71 // pred_check
          %p536 = pneg %p50
        $region74: #{tpu_custom_call.1} parent=71 // pred_check_branch
          %538 = sbr.rel (%p536) target = $region76
        $region75: #{tpu_custom_call.1} parent=71 // pred_region
          %s539 = smul.u32 16, %s30
          %p540 = scmp.lt.s32.totalorder %s539, 31
          %s541 = scalar_select %p540, %s539, 31
          %s542 = smul.addr %s541, 8
          %s543 = scalar_lea.vmem %s0, %s542
          %s544 = smul.u32 16, %s30
        $region76: #{tpu_custom_call.1} parent=71 // pred_fallthru
          _
        // Predicated region
        $region77: #{tpu_custom_call.1} parent=71 // pred_check
          %p545 = pneg %p76
        $region78: #{tpu_custom_call.1} parent=71 // pred_check_branch
          %547 = sbr.rel (%p545) target = $region80
        $region79: #{tpu_custom_call.1} parent=71 // pred_region
          %s548 = smul.u32 16, %s30
          %p549 = scmp.lt.s32.totalorder %s548, 31
          %s550 = scalar_select %p549, %s548, 31
          %s551 = smul.addr %s550, 8
          %s552 = scalar_lea.vmem %s1, %s551
          %s553 = smul.u32 16, %s30
        $region80: #{tpu_custom_call.1} parent=71 // pred_fallthru
          _
        // Predicated region
        $region81: #{tpu_custom_call.1} parent=71 // pred_check
          %p554 = pneg %p102
        $region82: #{tpu_custom_call.1} parent=71 // pred_check_branch
          %556 = sbr.rel (%p554) target = $region84
        $region83: #{tpu_custom_call.1} parent=71 // pred_region
          %p557 = scmp.lt.s32.totalorder %s30, 1
          %s558 = scalar_select %p557, %s30, 1
          %s559 = scalar_lea.vmem %s2, %s558
        $region84: #{tpu_custom_call.1} parent=71 // pred_fallthru
          _
        // Predicated region
        $region85: #{tpu_custom_call.1} parent=71 // pred_check
          %p560 = pneg %p170
        $region86: #{tpu_custom_call.1} parent=71 // pred_check_branch
          %562 = sbr.rel (%p560) target = $region88
        $region87: #{tpu_custom_call.1} parent=71 // pred_region
          %s563 = smul.u32 16, %s30
          %p564 = scmp.lt.s32.totalorder %s563, 31
          %s565 = scalar_select %p564, %s563, 31
          %s566 = smul.addr %s565, 8
          %s567 = scalar_lea.vmem %s5, %s566
          %s568 = smul.u32 16, %s30
        $region88: #{tpu_custom_call.1} parent=71 // pred_fallthru
          _
      $region72: #{tpu_custom_call.1} parent=5 // pred_fallthru
        _
      %p569 = scmp.le.s32.totalorder 1, %s30
      %p570 = scmp.lt.s32.totalorder %s30, 3
      %p571 = pnand %p569, %p570
      %p572 = pneg %p571
      // Predicated region
      $region89: #{tpu_custom_call.1} parent=5 // pred_check
        _
      $region90: #{tpu_custom_call.1} parent=5 // pred_check_branch
        %574 = sbr.rel (%p571) target = $region92
      $region91: #{tpu_custom_call.1} parent=5 // pred_region
        %s575 = ssub.s32 %s30, 1
        %s576 = smul.u32 16, %s35
        %p577 = scmp.lt.s32.totalorder %s576, 31
        %s578 = scalar_select %p577, %s576, 31
        %s579 = smul.addr %s578, 8
        %s580 = scalar_lea.vmem %s0, %s579
        %p581 = pneg %p56
        %p582 = pneg %p53
        %s583 = smul.u32 16, %s35
        %p584 = scmp.lt.s32.totalorder %s583, 31
        %s585 = scalar_select %p584, %s583, 31
        %s586 = smul.addr %s585, 8
        %s587 = scalar_lea.vmem %s1, %s586
        %p588 = pneg %p82
        %p589 = pneg %p79
        %p590 = scmp.lt.s32.totalorder %s35, 1
        %s591 = scalar_select %p590, %s35, 1
        %s592 = scalar_lea.vmem %s2, %s591
        %p593 = pneg %p108
        %p594 = pneg %p105
        %p595 = pneg %p129
        %p596 = pneg %p126
        %p597 = pneg %p150
        %p598 = pneg %p147
        %s599 = smul.u32 16, %s35
        %p600 = scmp.lt.s32.totalorder %s599, 31
        %s601 = scalar_select %p600, %s599, 31
        %s602 = smul.addr %s601, 8
        %s603 = scalar_lea.vmem %s5, %s602
        %p604 = pneg %p176
        %p605 = pneg %p173
        %p606 = pneg %p197
        %p607 = pneg %p194
        %p608 = pneg %p218
        %p609 = pneg %p215
        %p610 = pneg %p239
        %p611 = pneg %p236
        %p612 = pneg %p260
        %p613 = pneg %p257
        %p614 = pneg %p281
        %p615 = pneg %p278
        %p616 = pneg %p302
        %p617 = pneg %p299
        %p618 = pneg %p323
        %p619 = pneg %p320
        %p620 = pneg %p344
        %p621 = pneg %p341
        %p622 = pneg %p365
        %p623 = pneg %p362
        %p624 = pneg %p386
        %p625 = pneg %p383
        %p626 = pneg %p407
        %p627 = pneg %p404
        %p628 = pneg %p428
        %p629 = pneg %p425
        %p630 = pneg %p454
        %p631 = pneg %p451
        %s632 = sand.u32 %s441, 1
        %s633 = scalar_lea.sflag [#allocation7], %s632
        %s634 = sand.u32 %s441, 1
        %s635 = smul.addr %s634, 128
        %s636 = scalar_lea.vmem [#allocation6], %s635
        %p637 = pneg %p475
        %p638 = pneg %p472
        %s639 = smul.u32 16, %s35
        %p640 = scmp.lt.s32.totalorder %s639, 31
        %s641 = scalar_select %p640, %s639, 31
        %s642 = smul.addr %s641, 8
        %s643 = scalar_lea.vmem %s0, %s642
        %s644 = smul.u32 16, %s35
        %s645 = smul.u32 16, %s35
        %p646 = scmp.lt.s32.totalorder %s645, 31
        %s647 = scalar_select %p646, %s645, 31
        %s648 = smul.addr %s647, 8
        %s649 = scalar_lea.vmem %s1, %s648
        %s650 = smul.u32 16, %s35
        %p651 = scmp.lt.s32.totalorder %s35, 1
        %s652 = scalar_select %p651, %s35, 1
        %s653 = scalar_lea.vmem %s2, %s652
        %s654 = smul.u32 16, %s35
        %p655 = scmp.lt.s32.totalorder %s654, 31
        %s656 = scalar_select %p655, %s654, 31
        %s657 = smul.addr %s656, 8
        %s658 = scalar_lea.vmem %s5, %s657
        %s659 = smul.u32 16, %s35
        %s660 = smul.u32 16, %s35
        %p661 = scmp.eq.s32.totalorder %s35, 0
        // Predicated region
        $region93: #{tpu_custom_call.1} parent=91 // pred_check
          %p662 = pneg %p661
        $region94: #{tpu_custom_call.1} parent=91 // pred_check_branch
          %664 = sbr.rel (%p662) target = $region96
        $region95: #{tpu_custom_call.1} parent=91 // pred_region
          %v665 = vld [vmem:[%s3] sm:$0xff]
          %v666 = vld [vmem:[%s3 + $0x8] sm:$0xff]
          %v667 = vld [vmem:[%s6] sm:$0xff]
          %v668 = vld [vmem:[%s6 + $0x8] sm:$0xff]
          %v669 = vld [vmem:[%s6 + $0x10] sm:$0xff]
          %v670 = vld [vmem:[%s6 + $0x18] sm:$0xff]
          %vm671 = vcmask 261120
          %v673 = vsel %vm671, %v665, 0
          %v676 = vsel %vm671, %v666, 0
          %678 = vmatprep.subr.mxu0 0.0
          %679 = vmatpush1.msra.mxu0 0.0
          %680 = vmatprep.subr.mxu0 0.0
          %681 = vmatpush1.msra.mxu0 0.0
          %682 = vmatprep.subr.mxu0 0.0
          %683 = vmatpush1.msra.mxu0 0.0
          %684 = vmatprep.subr.mxu0 0.0
          %685 = vmatpush1.msra.mxu0 0.0
          %686 = vmatprep.subr.mxu0 0.0
          %687 = vmatpush1.msra.mxu0 0.0
          %688 = vmatprep.subr.mxu0 0.0
          %689 = vmatpush1.msra.mxu0 0.0
          %690 = vmatprep.subr.mxu0 0.0
          %691 = vmatpush1.msra.mxu0 0.0
          %692 = vmatprep.subr.mxu0 0.0
          %693 = vmatpush1.msra.mxu0 0.0
          %694 = vmatprep.subr.mxu0 0.0
          %695 = vmatpush1.msra.mxu0 0.0
          %696 = vmatprep.subr.mxu0 0.0
          %697 = vmatpush1.msra.mxu0 0.0
          %698 = vmatprep.subr.mxu0 0.0
          %699 = vmatpush1.msra.mxu0 0.0
          %700 = vmatprep.subr.mxu0 0.0
          %701 = vmatpush1.msra.mxu0 0.0
          %702 = vmatprep.subr.mxu0 0.0
          %703 = vmatpush1.msra.mxu0 %v670
          %704 = vmatprep.subr.mxu0 0.0
          %705 = vmatpush1.msra.mxu0 %v669
          %706 = vmatprep.subr.mxu0 0.0
          %707 = vmatpush1.msra.mxu0 %v668
          %708 = vmatprep.subr.mxu0 0.0
          %709 = vmatpush1.msra.mxu0 %v667
          %710 = vmatprep.subr.mxu0 0.0
          %711 = vmatpush2.msra.mxu0 0.0
          %712 = vmatprep.subr.mxu0 0.0
          %713 = vmatpush2.msra.mxu0 0.0
          %714 = vmatprep.subr.mxu0 0.0
          %715 = vmatpush2.msra.mxu0 0.0
          %716 = vmatprep.subr.mxu0 0.0
          %717 = vmatpush2.msra.mxu0 0.0
          %718 = vmatprep.subr.mxu0 0.0
          %719 = vmatpush2.msra.mxu0 0.0
          %720 = vmatprep.subr.mxu0 0.0
          %721 = vmatpush2.msra.mxu0 0.0
          %722 = vmatprep.subr.mxu0 0.0
          %723 = vmatpush2.msra.mxu0 0.0
          %724 = vmatprep.subr.mxu0 0.0
          %725 = vmatpush2.msra.mxu0 0.0
          %726 = vmatprep.subr.mxu0 0.0
          %727 = vmatpush2.msra.mxu0 0.0
          %728 = vmatprep.subr.mxu0 0.0
          %729 = vmatpush2.msra.mxu0 0.0
          %730 = vmatprep.subr.mxu0 0.0
          %731 = vmatpush2.msra.mxu0 0.0
          %732 = vmatprep.subr.mxu0 0.0
          %733 = vmatpush2.msra.mxu0 0.0
          %734 = vmatprep.subr.mxu0 0.0
          %735 = vmatpush2.msra.mxu0 0.0
          %736 = vmatprep.subr.mxu0 0.0
          %737 = vmatpush2.msra.mxu0 0.0
          %738 = vmatprep.subr.mxu0 0.0
          %739 = vmatpush2.msra.mxu0 0.0
          %740 = vmatprep.subr.mxu0 0.0
          %741 = vmatpush2.msra.mxu0 0.0
          %742 = vmatprep.mubr.f32.mxu0 0.0
          %743 = vmatmul.mubr.f32.gmra.mxu0 %v673
          %v744 = vpop.f32.mrf.mxu0
          %v745 = vadd.f32 0.0, %v744
          %v746 = vpop.f32.mrf.mxu0
          %747 = vmatprep.mubr.f32.mxu0 0.0
          %748 = vmatmul.mubr.f32.gmra.mxu0 %v676
          %v749 = vpop.f32.mrf.mxu0
          %v750 = vadd.f32 0.0, %v749
          %v751 = vpop.f32.mrf.mxu0
          %752 = vdwg.mxu0
          %753 = vst [vmem:[#allocation2] sm:$0xff] %v745
          %754 = vst [vmem:[#allocation2 + $0x8] sm:$0xff] %v750
          %v755 = vld [vmem:[%s3] sm:$0xff]
          %v756 = vld [vmem:[%s3 + $0x8] sm:$0xff]
          %v757 = vld [vmem:[%s7] sm:$0xff]
          %v758 = vld [vmem:[%s7 + $0x8] sm:$0xff]
          %v759 = vld [vmem:[%s7 + $0x10] sm:$0xff]
          %v760 = vld [vmem:[%s7 + $0x18] sm:$0xff]
          %v762 = vsel %vm671, %v755, 0
          %v765 = vsel %vm671, %v756, 0
          %767 = vmatprep.subr.mxu0 0.0
          %768 = vmatpush1.msra.mxu0 0.0
          %769 = vmatprep.subr.mxu0 0.0
          %770 = vmatpush1.msra.mxu0 0.0
          %771 = vmatprep.subr.mxu0 0.0
          %772 = vmatpush1.msra.mxu0 0.0
          %773 = vmatprep.subr.mxu0 0.0
          %774 = vmatpush1.msra.mxu0 0.0
          %775 = vmatprep.subr.mxu0 0.0
          %776 = vmatpush1.msra.mxu0 0.0
          %777 = vmatprep.subr.mxu0 0.0
          %778 = vmatpush1.msra.mxu0 0.0
          %779 = vmatprep.subr.mxu0 0.0
          %780 = vmatpush1.msra.mxu0 0.0
          %781 = vmatprep.subr.mxu0 0.0
          %782 = vmatpush1.msra.mxu0 0.0
          %783 = vmatprep.subr.mxu0 0.0
          %784 = vmatpush1.msra.mxu0 0.0
          %785 = vmatprep.subr.mxu0 0.0
          %786 = vmatpush1.msra.mxu0 0.0
          %787 = vmatprep.subr.mxu0 0.0
          %788 = vmatpush1.msra.mxu0 0.0
          %789 = vmatprep.subr.mxu0 0.0
          %790 = vmatpush1.msra.mxu0 0.0
          %791 = vmatprep.subr.mxu0 0.0
          %792 = vmatpush1.msra.mxu0 %v760
          %793 = vmatprep.subr.mxu0 0.0
          %794 = vmatpush1.msra.mxu0 %v759
          %795 = vmatprep.subr.mxu0 0.0
          %796 = vmatpush1.msra.mxu0 %v758
          %797 = vmatprep.subr.mxu0 0.0
          %798 = vmatpush1.msra.mxu0 %v757
          %799 = vmatprep.subr.mxu0 0.0
          %800 = vmatpush2.msra.mxu0 0.0
          %801 = vmatprep.subr.mxu0 0.0
          %802 = vmatpush2.msra.mxu0 0.0
          %803 = vmatprep.subr.mxu0 0.0
          %804 = vmatpush2.msra.mxu0 0.0
          %805 = vmatprep.subr.mxu0 0.0
          %806 = vmatpush2.msra.mxu0 0.0
          %807 = vmatprep.subr.mxu0 0.0
          %808 = vmatpush2.msra.mxu0 0.0
          %809 = vmatprep.subr.mxu0 0.0
          %810 = vmatpush2.msra.mxu0 0.0
          %811 = vmatprep.subr.mxu0 0.0
          %812 = vmatpush2.msra.mxu0 0.0
          %813 = vmatprep.subr.mxu0 0.0
          %814 = vmatpush2.msra.mxu0 0.0
          %815 = vmatprep.subr.mxu0 0.0
          %816 = vmatpush2.msra.mxu0 0.0
          %817 = vmatprep.subr.mxu0 0.0
          %818 = vmatpush2.msra.mxu0 0.0
          %819 = vmatprep.subr.mxu0 0.0
          %820 = vmatpush2.msra.mxu0 0.0
          %821 = vmatprep.subr.mxu0 0.0
          %822 = vmatpush2.msra.mxu0 0.0
          %823 = vmatprep.subr.mxu0 0.0
          %824 = vmatpush2.msra.mxu0 0.0
          %825 = vmatprep.subr.mxu0 0.0
          %826 = vmatpush2.msra.mxu0 0.0
          %827 = vmatprep.subr.mxu0 0.0
          %828 = vmatpush2.msra.mxu0 0.0
          %829 = vmatprep.subr.mxu0 0.0
          %830 = vmatpush2.msra.mxu0 0.0
          %831 = vmatprep.mubr.f32.mxu0 0.0
          %832 = vmatmul.mubr.f32.gmra.mxu0 %v762
          %v833 = vpop.f32.mrf.mxu0
          %v834 = vadd.f32 0.0, %v833
          %v835 = vpop.f32.mrf.mxu0
          %836 = vmatprep.mubr.f32.mxu0 0.0
          %837 = vmatmul.mubr.f32.gmra.mxu0 %v765
          %v838 = vpop.f32.mrf.mxu0
          %v839 = vadd.f32 0.0, %v838
          %v840 = vpop.f32.mrf.mxu0
          %841 = vdwg.mxu0
          %842 = vst [vmem:[#allocation3] sm:$0xff] %v834
          %843 = vst [vmem:[#allocation3 + $0x8] sm:$0xff] %v839
          %844 = vst [vmem:[#allocation4] sm:$0xff] 0.0
          %845 = vst [vmem:[#allocation4 + $0x8] sm:$0xff] 0.0
          %vm846 = vcmask 7168
          %847 = vst.msk [vmem:[#allocation5] sm:$0xff] %vm846, 0.0
          %848 = vst.msk [vmem:[#allocation5 + $0x8] sm:$0xff] %vm846, 0.0
        $region96: #{tpu_custom_call.1} parent=91 // pred_fallthru
          _
        %v849 = vlaneseq
        %v850 = vand.u32 %v849, 127
        %v851 = vld [vmem:[%s643] sm:$0xff]
        %v852 = vld [vmem:[%s643 + $0x8] sm:$0xff]
        %v853 = vld [vmem:[%s643 + $0x10] sm:$0xff]
        %v854 = vld [vmem:[%s643 + $0x18] sm:$0xff]
        %v855 = vld [vmem:[%s643 + $0x20] sm:$0xff]
        %v856 = vld [vmem:[%s643 + $0x28] sm:$0xff]
        %v857 = vld [vmem:[%s643 + $0x30] sm:$0xff]
        %v858 = vld [vmem:[%s643 + $0x38] sm:$0xff]
        %v859 = vld [vmem:[%s643 + $0x40] sm:$0xff]
        %v860 = vld [vmem:[%s643 + $0x48] sm:$0xff]
        %v861 = vld [vmem:[%s643 + $0x50] sm:$0xff]
        %v862 = vld [vmem:[%s643 + $0x58] sm:$0xff]
        %v863 = vld [vmem:[%s643 + $0x60] sm:$0xff]
        %v864 = vld [vmem:[%s643 + $0x68] sm:$0xff]
        %v865 = vld [vmem:[%s643 + $0x70] sm:$0xff]
        %v866 = vld [vmem:[%s643 + $0x78] sm:$0xff]
        %867 = vset.pattern.permute.xlu0 0
        %868 = vperm.xlu0 %867, %v851
        %v869 = vpop.permute.xlu0 %868
        %870 = vset.pattern.permute.xlu0 0
        %871 = vperm.xlu0 %870, %v852
        %v872 = vpop.permute.xlu0 %871
        %873 = vset.pattern.permute.xlu0 0
        %874 = vperm.xlu0 %873, %v853
        %v875 = vpop.permute.xlu0 %874
        %876 = vset.pattern.permute.xlu0 0
        %877 = vperm.xlu0 %876, %v854
        %v878 = vpop.permute.xlu0 %877
        %879 = vset.pattern.permute.xlu0 0
        %880 = vperm.xlu0 %879, %v855
        %v881 = vpop.permute.xlu0 %880
        %882 = vset.pattern.permute.xlu0 0
        %883 = vperm.xlu0 %882, %v856
        %v884 = vpop.permute.xlu0 %883
        %885 = vset.pattern.permute.xlu0 0
        %886 = vperm.xlu0 %885, %v857
        %v887 = vpop.permute.xlu0 %886
        %888 = vset.pattern.permute.xlu0 0
        %889 = vperm.xlu0 %888, %v858
        %v890 = vpop.permute.xlu0 %889
        %891 = vset.pattern.permute.xlu0 0
        %892 = vperm.xlu0 %891, %v859
        %v893 = vpop.permute.xlu0 %892
        %894 = vset.pattern.permute.xlu0 0
        %895 = vperm.xlu0 %894, %v860
        %v896 = vpop.permute.xlu0 %895
        %897 = vset.pattern.permute.xlu0 0
        %898 = vperm.xlu0 %897, %v861
        %v899 = vpop.permute.xlu0 %898
        %900 = vset.pattern.permute.xlu0 0
        %901 = vperm.xlu0 %900, %v862
        %v902 = vpop.permute.xlu0 %901
        %903 = vset.pattern.permute.xlu0 0
        %904 = vperm.xlu0 %903, %v863
        %v905 = vpop.permute.xlu0 %904
        %906 = vset.pattern.permute.xlu0 0
        %907 = vperm.xlu0 %906, %v864
        %v908 = vpop.permute.xlu0 %907
        %909 = vset.pattern.permute.xlu0 0
        %910 = vperm.xlu0 %909, %v865
        %v911 = vpop.permute.xlu0 %910
        %912 = vset.pattern.permute.xlu0 0
        %913 = vperm.xlu0 %912, %v866
        %v914 = vpop.permute.xlu0 %913
        %vm915 = vcmp.eq.s32.totalorder %v869, %v850
        %vm916 = vcmp.eq.s32.totalorder %v872, %v850
        %vm917 = vcmp.eq.s32.totalorder %v875, %v850
        %vm918 = vcmp.eq.s32.totalorder %v878, %v850
        %vm919 = vcmp.eq.s32.totalorder %v881, %v850
        %vm920 = vcmp.eq.s32.totalorder %v884, %v850
        %vm921 = vcmp.eq.s32.totalorder %v887, %v850
        %vm922 = vcmp.eq.s32.totalorder %v890, %v850
        %vm923 = vcmp.eq.s32.totalorder %v893, %v850
        %vm924 = vcmp.eq.s32.totalorder %v896, %v850
        %vm925 = vcmp.eq.s32.totalorder %v899, %v850
        %vm926 = vcmp.eq.s32.totalorder %v902, %v850
        %vm927 = vcmp.eq.s32.totalorder %v905, %v850
        %vm928 = vcmp.eq.s32.totalorder %v908, %v850
        %vm929 = vcmp.eq.s32.totalorder %v911, %v850
        %vm930 = vcmp.eq.s32.totalorder %v914, %v850
        %v931 = vsel %vm915, 1, 0
        %v932 = vsel %vm916, 1, 0
        %v933 = vsel %vm917, 1, 0
        %v934 = vsel %vm918, 1, 0
        %v935 = vsel %vm919, 1, 0
        %v936 = vsel %vm920, 1, 0
        %v937 = vsel %vm921, 1, 0
        %v938 = vsel %vm922, 1, 0
        %v939 = vsel %vm923, 1, 0
        %v940 = vsel %vm924, 1, 0
        %v941 = vsel %vm925, 1, 0
        %v942 = vsel %vm926, 1, 0
        %v943 = vsel %vm927, 1, 0
        %v944 = vsel %vm928, 1, 0
        %v945 = vsel %vm929, 1, 0
        %v946 = vsel %vm930, 1, 0
        %v947 = vcvt.s32.f32 %v931
        %v948 = vcvt.s32.f32 %v932
        %v949 = vcvt.s32.f32 %v933
        %v950 = vcvt.s32.f32 %v934
        %v951 = vcvt.s32.f32 %v935
        %v952 = vcvt.s32.f32 %v936
        %v953 = vcvt.s32.f32 %v937
        %v954 = vcvt.s32.f32 %v938
        %v955 = vcvt.s32.f32 %v939
        %v956 = vcvt.s32.f32 %v940
        %v957 = vcvt.s32.f32 %v941
        %v958 = vcvt.s32.f32 %v942
        %v959 = vcvt.s32.f32 %v943
        %v960 = vcvt.s32.f32 %v944
        %v961 = vcvt.s32.f32 %v945
        %v962 = vcvt.s32.f32 %v946
        %v963 = vld [vmem:[%s649] sm:$0xff]
        %v964 = vld [vmem:[%s649 + $0x8] sm:$0xff]
        %v965 = vld [vmem:[%s649 + $0x10] sm:$0xff]
        %v966 = vld [vmem:[%s649 + $0x18] sm:$0xff]
        %v967 = vld [vmem:[%s649 + $0x20] sm:$0xff]
        %v968 = vld [vmem:[%s649 + $0x28] sm:$0xff]
        %v969 = vld [vmem:[%s649 + $0x30] sm:$0xff]
        %v970 = vld [vmem:[%s649 + $0x38] sm:$0xff]
        %v971 = vld [vmem:[%s649 + $0x40] sm:$0xff]
        %v972 = vld [vmem:[%s649 + $0x48] sm:$0xff]
        %v973 = vld [vmem:[%s649 + $0x50] sm:$0xff]
        %v974 = vld [vmem:[%s649 + $0x58] sm:$0xff]
        %v975 = vld [vmem:[%s649 + $0x60] sm:$0xff]
        %v976 = vld [vmem:[%s649 + $0x68] sm:$0xff]
        %v977 = vld [vmem:[%s649 + $0x70] sm:$0xff]
        %v978 = vld [vmem:[%s649 + $0x78] sm:$0xff]
        %979 = vset.pattern.permute.xlu0 0
        %980 = vperm.xlu0 %979, %v963
        %v981 = vpop.permute.xlu0 %980
        %982 = vset.pattern.permute.xlu0 0
        %983 = vperm.xlu0 %982, %v964
        %v984 = vpop.permute.xlu0 %983
        %985 = vset.pattern.permute.xlu0 0
        %986 = vperm.xlu0 %985, %v965
        %v987 = vpop.permute.xlu0 %986
        %988 = vset.pattern.permute.xlu0 0
        %989 = vperm.xlu0 %988, %v966
        %v990 = vpop.permute.xlu0 %989
        %991 = vset.pattern.permute.xlu0 0
        %992 = vperm.xlu0 %991, %v967
        %v993 = vpop.permute.xlu0 %992
        %994 = vset.pattern.permute.xlu0 0
        %995 = vperm.xlu0 %994, %v968
        %v996 = vpop.permute.xlu0 %995
        %997 = vset.pattern.permute.xlu0 0
        %998 = vperm.xlu0 %997, %v969
        %v999 = vpop.permute.xlu0 %998
        %1000 = vset.pattern.permute.xlu0 0
        %1001 = vperm.xlu0 %1000, %v970
        %v1002 = vpop.permute.xlu0 %1001
        %1003 = vset.pattern.permute.xlu0 0
        %1004 = vperm.xlu0 %1003, %v971
        %v1005 = vpop.permute.xlu0 %1004
        %1006 = vset.pattern.permute.xlu0 0
        %1007 = vperm.xlu0 %1006, %v972
        %v1008 = vpop.permute.xlu0 %1007
        %1009 = vset.pattern.permute.xlu0 0
        %1010 = vperm.xlu0 %1009, %v973
        %v1011 = vpop.permute.xlu0 %1010
        %1012 = vset.pattern.permute.xlu0 0
        %1013 = vperm.xlu0 %1012, %v974
        %v1014 = vpop.permute.xlu0 %1013
        %1015 = vset.pattern.permute.xlu0 0
        %1016 = vperm.xlu0 %1015, %v975
        %v1017 = vpop.permute.xlu0 %1016
        %1018 = vset.pattern.permute.xlu0 0
        %1019 = vperm.xlu0 %1018, %v976
        %v1020 = vpop.permute.xlu0 %1019
        %1021 = vset.pattern.permute.xlu0 0
        %1022 = vperm.xlu0 %1021, %v977
        %v1023 = vpop.permute.xlu0 %1022
        %1024 = vset.pattern.permute.xlu0 0
        %1025 = vperm.xlu0 %1024, %v978
        %v1026 = vpop.permute.xlu0 %1025
        %vm1027 = vcmp.eq.s32.totalorder %v981, %v850
        %vm1028 = vcmp.eq.s32.totalorder %v984, %v850
        %vm1029 = vcmp.eq.s32.totalorder %v987, %v850
        %vm1030 = vcmp.eq.s32.totalorder %v990, %v850
        %vm1031 = vcmp.eq.s32.totalorder %v993, %v850
        %vm1032 = vcmp.eq.s32.totalorder %v996, %v850
        %vm1033 = vcmp.eq.s32.totalorder %v999, %v850
        %vm1034 = vcmp.eq.s32.totalorder %v1002, %v850
        %vm1035 = vcmp.eq.s32.totalorder %v1005, %v850
        %vm1036 = vcmp.eq.s32.totalorder %v1008, %v850
        %vm1037 = vcmp.eq.s32.totalorder %v1011, %v850
        %vm1038 = vcmp.eq.s32.totalorder %v1014, %v850
        %vm1039 = vcmp.eq.s32.totalorder %v1017, %v850
        %vm1040 = vcmp.eq.s32.totalorder %v1020, %v850
        %vm1041 = vcmp.eq.s32.totalorder %v1023, %v850
        %vm1042 = vcmp.eq.s32.totalorder %v1026, %v850
        %v1043 = vsel %vm1027, 1, 0
        %v1044 = vsel %vm1028, 1, 0
        %v1045 = vsel %vm1029, 1, 0
        %v1046 = vsel %vm1030, 1, 0
        %v1047 = vsel %vm1031, 1, 0
        %v1048 = vsel %vm1032, 1, 0
        %v1049 = vsel %vm1033, 1, 0
        %v1050 = vsel %vm1034, 1, 0
        %v1051 = vsel %vm1035, 1, 0
        %v1052 = vsel %vm1036, 1, 0
        %v1053 = vsel %vm1037, 1, 0
        %v1054 = vsel %vm1038, 1, 0
        %v1055 = vsel %vm1039, 1, 0
        %v1056 = vsel %vm1040, 1, 0
        %v1057 = vsel %vm1041, 1, 0
        %v1058 = vsel %vm1042, 1, 0
        %v1059 = vcvt.s32.f32 %v1043
        %v1060 = vcvt.s32.f32 %v1044
        %v1061 = vcvt.s32.f32 %v1045
        %v1062 = vcvt.s32.f32 %v1046
        %v1063 = vcvt.s32.f32 %v1047
        %v1064 = vcvt.s32.f32 %v1048
        %v1065 = vcvt.s32.f32 %v1049
        %v1066 = vcvt.s32.f32 %v1050
        %v1067 = vcvt.s32.f32 %v1051
        %v1068 = vcvt.s32.f32 %v1052
        %v1069 = vcvt.s32.f32 %v1053
        %v1070 = vcvt.s32.f32 %v1054
        %v1071 = vcvt.s32.f32 %v1055
        %v1072 = vcvt.s32.f32 %v1056
        %v1073 = vcvt.s32.f32 %v1057
        %v1074 = vcvt.s32.f32 %v1058
        %v1075 = vld [vmem:[#allocation2] sm:$0xff]
        %v1076 = vld [vmem:[#allocation2 + $0x8] sm:$0xff]
        %v1077 = vld [vmem:[#allocation3] sm:$0xff]
        %v1078 = vld [vmem:[#allocation3 + $0x8] sm:$0xff]
        %vm1079 = vcmask 130048
        %v1081 = vsel %vm1079, %v1059, 0
        %v1084 = vsel %vm1079, %v1060, 0
        %v1087 = vsel %vm1079, %v1061, 0
        %v1090 = vsel %vm1079, %v1062, 0
        %v1093 = vsel %vm1079, %v1063, 0
        %v1096 = vsel %vm1079, %v1064, 0
        %v1099 = vsel %vm1079, %v1065, 0
        %v1102 = vsel %vm1079, %v1066, 0
        %v1105 = vsel %vm1079, %v1067, 0
        %v1108 = vsel %vm1079, %v1068, 0
        %v1111 = vsel %vm1079, %v1069, 0
        %v1114 = vsel %vm1079, %v1070, 0
        %v1117 = vsel %vm1079, %v1071, 0
        %v1120 = vsel %vm1079, %v1072, 0
        %v1123 = vsel %vm1079, %v1073, 0
        %v1126 = vsel %vm1079, %v1074, 0
        %1128 = vmatprep.subr.mxu0 0.0
        %1129 = vmatpush1.msra.mxu0 0.0
        %1130 = vmatprep.subr.mxu0 0.0
        %1131 = vmatpush1.msra.mxu0 0.0
        %1132 = vmatprep.subr.mxu0 0.0
        %1133 = vmatpush1.msra.mxu0 0.0
        %1134 = vmatprep.subr.mxu0 0.0
        %1135 = vmatpush1.msra.mxu0 0.0
        %1136 = vmatprep.subr.mxu0 0.0
        %1137 = vmatpush1.msra.mxu0 0.0
        %1138 = vmatprep.subr.mxu0 0.0
        %1139 = vmatpush1.msra.mxu0 0.0
        %1140 = vmatprep.subr.mxu0 0.0
        %1141 = vmatpush1.msra.mxu0 0.0
        %1142 = vmatprep.subr.mxu0 0.0
        %1143 = vmatpush1.msra.mxu0 0.0
        %1144 = vmatprep.subr.mxu0 0.0
        %1145 = vmatpush1.msra.mxu0 0.0
        %1146 = vmatprep.subr.mxu0 0.0
        %1147 = vmatpush1.msra.mxu0 0.0
        %1148 = vmatprep.subr.mxu0 0.0
        %1149 = vmatpush1.msra.mxu0 0.0
        %1150 = vmatprep.subr.mxu0 0.0
        %1151 = vmatpush1.msra.mxu0 0.0
        %1152 = vmatprep.subr.mxu0 0.0
        %1153 = vmatpush1.msra.mxu0 0.0
        %1154 = vmatprep.subr.mxu0 0.0
        %1155 = vmatpush1.msra.mxu0 0.0
        %1156 = vmatprep.subr.mxu0 0.0
        %1157 = vmatpush1.msra.mxu0 %v1078
        %1158 = vmatprep.subr.mxu0 0.0
        %1159 = vmatpush1.msra.mxu0 %v1077
        %1160 = vmatprep.subr.mxu0 0.0
        %1161 = vmatpush2.msra.mxu0 0.0
        %1162 = vmatprep.subr.mxu0 0.0
        %1163 = vmatpush2.msra.mxu0 0.0
        %1164 = vmatprep.subr.mxu0 0.0
        %1165 = vmatpush2.msra.mxu0 0.0
        %1166 = vmatprep.subr.mxu0 0.0
        %1167 = vmatpush2.msra.mxu0 0.0
        %1168 = vmatprep.subr.mxu0 0.0
        %1169 = vmatpush2.msra.mxu0 0.0
        %1170 = vmatprep.subr.mxu0 0.0
        %1171 = vmatpush2.msra.mxu0 0.0
        %1172 = vmatprep.subr.mxu0 0.0
        %1173 = vmatpush2.msra.mxu0 0.0
        %1174 = vmatprep.subr.mxu0 0.0
        %1175 = vmatpush2.msra.mxu0 0.0
        %1176 = vmatprep.subr.mxu0 0.0
        %1177 = vmatpush2.msra.mxu0 0.0
        %1178 = vmatprep.subr.mxu0 0.0
        %1179 = vmatpush2.msra.mxu0 0.0
        %1180 = vmatprep.subr.mxu0 0.0
        %1181 = vmatpush2.msra.mxu0 0.0
        %1182 = vmatprep.subr.mxu0 0.0
        %1183 = vmatpush2.msra.mxu0 0.0
        %1184 = vmatprep.subr.mxu0 0.0
        %1185 = vmatpush2.msra.mxu0 0.0
        %1186 = vmatprep.subr.mxu0 0.0
        %1187 = vmatpush2.msra.mxu0 0.0
        %1188 = vmatprep.subr.mxu0 0.0
        %1189 = vmatpush2.msra.mxu0 0.0
        %1190 = vmatprep.subr.mxu0 0.0
        %1191 = vmatpush2.msra.mxu0 0.0
        %1192 = vmatprep.mubr.f32.mxu0 0.0
        %1193 = vmatmul.mubr.f32.gmra.mxu0 %v1081
        %v1194 = vpop.f32.mrf.mxu0
        %v1195 = vadd.f32 0.0, %v1194
        %v1196 = vpop.f32.mrf.mxu0
        %1197 = vmatprep.mubr.f32.mxu0 0.0
        %1198 = vmatmul.mubr.f32.gmra.mxu0 %v1084
        %v1199 = vpop.f32.mrf.mxu0
        %v1200 = vadd.f32 0.0, %v1199
        %v1201 = vpop.f32.mrf.mxu0
        %1202 = vmatprep.mubr.f32.mxu0 0.0
        %1203 = vmatmul.mubr.f32.gmra.mxu0 %v1087
        %v1204 = vpop.f32.mrf.mxu0
        %v1205 = vadd.f32 0.0, %v1204
        %v1206 = vpop.f32.mrf.mxu0
        %1207 = vmatprep.mubr.f32.mxu0 0.0
        %1208 = vmatmul.mubr.f32.gmra.mxu0 %v1090
        %v1209 = vpop.f32.mrf.mxu0
        %v1210 = vadd.f32 0.0, %v1209
        %v1211 = vpop.f32.mrf.mxu0
        %1212 = vmatprep.mubr.f32.mxu0 0.0
        %1213 = vmatmul.mubr.f32.gmra.mxu0 %v1093
        %v1214 = vpop.f32.mrf.mxu0
        %v1215 = vadd.f32 0.0, %v1214
        %v1216 = vpop.f32.mrf.mxu0
        %1217 = vmatprep.mubr.f32.mxu0 0.0
        %1218 = vmatmul.mubr.f32.gmra.mxu0 %v1096
        %v1219 = vpop.f32.mrf.mxu0
        %v1220 = vadd.f32 0.0, %v1219
        %v1221 = vpop.f32.mrf.mxu0
        %1222 = vmatprep.mubr.f32.mxu0 0.0
        %1223 = vmatmul.mubr.f32.gmra.mxu0 %v1099
        %v1224 = vpop.f32.mrf.mxu0
        %v1225 = vadd.f32 0.0, %v1224
        %v1226 = vpop.f32.mrf.mxu0
        %1227 = vmatprep.mubr.f32.mxu0 0.0
        %1228 = vmatmul.mubr.f32.gmra.mxu0 %v1102
        %v1229 = vpop.f32.mrf.mxu0
        %v1230 = vadd.f32 0.0, %v1229
        %v1231 = vpop.f32.mrf.mxu0
        %1232 = vmatprep.mubr.f32.mxu0 0.0
        %1233 = vmatmul.mubr.f32.gmra.mxu0 %v1105
        %v1234 = vpop.f32.mrf.mxu0
        %v1235 = vadd.f32 0.0, %v1234
        %v1236 = vpop.f32.mrf.mxu0
        %1237 = vmatprep.mubr.f32.mxu0 0.0
        %1238 = vmatmul.mubr.f32.gmra.mxu0 %v1108
        %v1239 = vpop.f32.mrf.mxu0
        %v1240 = vadd.f32 0.0, %v1239
        %v1241 = vpop.f32.mrf.mxu0
        %1242 = vmatprep.mubr.f32.mxu0 0.0
        %1243 = vmatmul.mubr.f32.gmra.mxu0 %v1111
        %v1244 = vpop.f32.mrf.mxu0
        %v1245 = vadd.f32 0.0, %v1244
        %v1246 = vpop.f32.mrf.mxu0
        %1247 = vmatprep.mubr.f32.mxu0 0.0
        %1248 = vmatmul.mubr.f32.gmra.mxu0 %v1114
        %v1249 = vpop.f32.mrf.mxu0
        %v1250 = vadd.f32 0.0, %v1249
        %v1251 = vpop.f32.mrf.mxu0
        %1252 = vmatprep.mubr.f32.mxu0 0.0
        %1253 = vmatmul.mubr.f32.gmra.mxu0 %v1117
        %v1254 = vpop.f32.mrf.mxu0
        %v1255 = vadd.f32 0.0, %v1254
        %v1256 = vpop.f32.mrf.mxu0
        %1257 = vmatprep.mubr.f32.mxu0 0.0
        %1258 = vmatmul.mubr.f32.gmra.mxu0 %v1120
        %v1259 = vpop.f32.mrf.mxu0
        %v1260 = vadd.f32 0.0, %v1259
        %v1261 = vpop.f32.mrf.mxu0
        %1262 = vmatprep.mubr.f32.mxu0 0.0
        %1263 = vmatmul.mubr.f32.gmra.mxu0 %v1123
        %v1264 = vpop.f32.mrf.mxu0
        %v1265 = vadd.f32 0.0, %v1264
        %v1266 = vpop.f32.mrf.mxu0
        %1267 = vmatprep.mubr.f32.mxu0 0.0
        %1268 = vmatmul.mubr.f32.gmra.mxu0 %v1126
        %v1269 = vpop.f32.mrf.mxu0
        %v1270 = vadd.f32 0.0, %v1269
        %v1271 = vpop.f32.mrf.mxu0
        %1272 = vdwg.mxu0
        %v1274 = vsel %vm1079, %v947, 0
        %v1277 = vsel %vm1079, %v948, 0
        %v1280 = vsel %vm1079, %v949, 0
        %v1283 = vsel %vm1079, %v950, 0
        %v1286 = vsel %vm1079, %v951, 0
        %v1289 = vsel %vm1079, %v952, 0
        %v1292 = vsel %vm1079, %v953, 0
        %v1295 = vsel %vm1079, %v954, 0
        %v1298 = vsel %vm1079, %v955, 0
        %v1301 = vsel %vm1079, %v956, 0
        %v1304 = vsel %vm1079, %v957, 0
        %v1307 = vsel %vm1079, %v958, 0
        %v1310 = vsel %vm1079, %v959, 0
        %v1313 = vsel %vm1079, %v960, 0
        %v1316 = vsel %vm1079, %v961, 0
        %v1319 = vsel %vm1079, %v962, 0
        %1321 = vmatprep.subr.mxu0 0.0
        %1322 = vmatpush1.msra.mxu0 0.0
        %1323 = vmatprep.subr.mxu0 0.0
        %1324 = vmatpush1.msra.mxu0 0.0
        %1325 = vmatprep.subr.mxu0 0.0
        %1326 = vmatpush1.msra.mxu0 0.0
        %1327 = vmatprep.subr.mxu0 0.0
        %1328 = vmatpush1.msra.mxu0 0.0
        %1329 = vmatprep.subr.mxu0 0.0
        %1330 = vmatpush1.msra.mxu0 0.0
        %1331 = vmatprep.subr.mxu0 0.0
        %1332 = vmatpush1.msra.mxu0 0.0
        %1333 = vmatprep.subr.mxu0 0.0
        %1334 = vmatpush1.msra.mxu0 0.0
        %1335 = vmatprep.subr.mxu0 0.0
        %1336 = vmatpush1.msra.mxu0 0.0
        %1337 = vmatprep.subr.mxu0 0.0
        %1338 = vmatpush1.msra.mxu0 0.0
        %1339 = vmatprep.subr.mxu0 0.0
        %1340 = vmatpush1.msra.mxu0 0.0
        %1341 = vmatprep.subr.mxu0 0.0
        %1342 = vmatpush1.msra.mxu0 0.0
        %1343 = vmatprep.subr.mxu0 0.0
        %1344 = vmatpush1.msra.mxu0 0.0
        %1345 = vmatprep.subr.mxu0 0.0
        %1346 = vmatpush1.msra.mxu0 0.0
        %1347 = vmatprep.subr.mxu0 0.0
        %1348 = vmatpush1.msra.mxu0 0.0
        %1349 = vmatprep.subr.mxu0 0.0
        %1350 = vmatpush1.msra.mxu0 %v1076
        %1351 = vmatprep.subr.mxu0 0.0
        %1352 = vmatpush1.msra.mxu0 %v1075
        %1353 = vmatprep.subr.mxu0 0.0
        %1354 = vmatpush2.msra.mxu0 0.0
        %1355 = vmatprep.subr.mxu0 0.0
        %1356 = vmatpush2.msra.mxu0 0.0
        %1357 = vmatprep.subr.mxu0 0.0
        %1358 = vmatpush2.msra.mxu0 0.0
        %1359 = vmatprep.subr.mxu0 0.0
        %1360 = vmatpush2.msra.mxu0 0.0
        %1361 = vmatprep.subr.mxu0 0.0
        %1362 = vmatpush2.msra.mxu0 0.0
        %1363 = vmatprep.subr.mxu0 0.0
        %1364 = vmatpush2.msra.mxu0 0.0
        %1365 = vmatprep.subr.mxu0 0.0
        %1366 = vmatpush2.msra.mxu0 0.0
        %1367 = vmatprep.subr.mxu0 0.0
        %1368 = vmatpush2.msra.mxu0 0.0
        %1369 = vmatprep.subr.mxu0 0.0
        %1370 = vmatpush2.msra.mxu0 0.0
        %1371 = vmatprep.subr.mxu0 0.0
        %1372 = vmatpush2.msra.mxu0 0.0
        %1373 = vmatprep.subr.mxu0 0.0
        %1374 = vmatpush2.msra.mxu0 0.0
        %1375 = vmatprep.subr.mxu0 0.0
        %1376 = vmatpush2.msra.mxu0 0.0
        %1377 = vmatprep.subr.mxu0 0.0
        %1378 = vmatpush2.msra.mxu0 0.0
        %1379 = vmatprep.subr.mxu0 0.0
        %1380 = vmatpush2.msra.mxu0 0.0
        %1381 = vmatprep.subr.mxu0 0.0
        %1382 = vmatpush2.msra.mxu0 0.0
        %1383 = vmatprep.subr.mxu0 0.0
        %1384 = vmatpush2.msra.mxu0 0.0
        %1385 = vmatprep.mubr.f32.mxu0 0.0
        %1386 = vmatmul.mubr.f32.gmra.mxu0 %v1274
        %v1387 = vpop.f32.mrf.mxu0
        %v1388 = vadd.f32 %v1195, %v1387
        %v1389 = vpop.f32.mrf.mxu0
        %1390 = vmatprep.mubr.f32.mxu0 0.0
        %1391 = vmatmul.mubr.f32.gmra.mxu0 %v1277
        %v1392 = vpop.f32.mrf.mxu0
        %v1393 = vadd.f32 %v1200, %v1392
        %v1394 = vpop.f32.mrf.mxu0
        %1395 = vmatprep.mubr.f32.mxu0 0.0
        %1396 = vmatmul.mubr.f32.gmra.mxu0 %v1280
        %v1397 = vpop.f32.mrf.mxu0
        %v1398 = vadd.f32 %v1205, %v1397
        %v1399 = vpop.f32.mrf.mxu0
        %1400 = vmatprep.mubr.f32.mxu0 0.0
        %1401 = vmatmul.mubr.f32.gmra.mxu0 %v1283
        %v1402 = vpop.f32.mrf.mxu0
        %v1403 = vadd.f32 %v1210, %v1402
        %v1404 = vpop.f32.mrf.mxu0
        %1405 = vmatprep.mubr.f32.mxu0 0.0
        %1406 = vmatmul.mubr.f32.gmra.mxu0 %v1286
        %v1407 = vpop.f32.mrf.mxu0
        %v1408 = vadd.f32 %v1215, %v1407
        %v1409 = vpop.f32.mrf.mxu0
        %1410 = vmatprep.mubr.f32.mxu0 0.0
        %1411 = vmatmul.mubr.f32.gmra.mxu0 %v1289
        %v1412 = vpop.f32.mrf.mxu0
        %v1413 = vadd.f32 %v1220, %v1412
        %v1414 = vpop.f32.mrf.mxu0
        %1415 = vmatprep.mubr.f32.mxu0 0.0
        %1416 = vmatmul.mubr.f32.gmra.mxu0 %v1292
        %v1417 = vpop.f32.mrf.mxu0
        %v1418 = vadd.f32 %v1225, %v1417
        %v1419 = vpop.f32.mrf.mxu0
        %1420 = vmatprep.mubr.f32.mxu0 0.0
        %1421 = vmatmul.mubr.f32.gmra.mxu0 %v1295
        %v1422 = vpop.f32.mrf.mxu0
        %v1423 = vadd.f32 %v1230, %v1422
        %v1424 = vpop.f32.mrf.mxu0
        %1425 = vmatprep.mubr.f32.mxu0 0.0
        %1426 = vmatmul.mubr.f32.gmra.mxu0 %v1298
        %v1427 = vpop.f32.mrf.mxu0
        %v1428 = vadd.f32 %v1235, %v1427
        %v1429 = vpop.f32.mrf.mxu0
        %1430 = vmatprep.mubr.f32.mxu0 0.0
        %1431 = vmatmul.mubr.f32.gmra.mxu0 %v1301
        %v1432 = vpop.f32.mrf.mxu0
        %v1433 = vadd.f32 %v1240, %v1432
        %v1434 = vpop.f32.mrf.mxu0
        %1435 = vmatprep.mubr.f32.mxu0 0.0
        %1436 = vmatmul.mubr.f32.gmra.mxu0 %v1304
        %v1437 = vpop.f32.mrf.mxu0
        %v1438 = vadd.f32 %v1245, %v1437
        %v1439 = vpop.f32.mrf.mxu0
        %1440 = vmatprep.mubr.f32.mxu0 0.0
        %1441 = vmatmul.mubr.f32.gmra.mxu0 %v1307
        %v1442 = vpop.f32.mrf.mxu0
        %v1443 = vadd.f32 %v1250, %v1442
        %v1444 = vpop.f32.mrf.mxu0
        %1445 = vmatprep.mubr.f32.mxu0 0.0
        %1446 = vmatmul.mubr.f32.gmra.mxu0 %v1310
        %v1447 = vpop.f32.mrf.mxu0
        %v1448 = vadd.f32 %v1255, %v1447
        %v1449 = vpop.f32.mrf.mxu0
        %1450 = vmatprep.mubr.f32.mxu0 0.0
        %1451 = vmatmul.mubr.f32.gmra.mxu0 %v1313
        %v1452 = vpop.f32.mrf.mxu0
        %v1453 = vadd.f32 %v1260, %v1452
        %v1454 = vpop.f32.mrf.mxu0
        %1455 = vmatprep.mubr.f32.mxu0 0.0
        %1456 = vmatmul.mubr.f32.gmra.mxu0 %v1316
        %v1457 = vpop.f32.mrf.mxu0
        %v1458 = vadd.f32 %v1265, %v1457
        %v1459 = vpop.f32.mrf.mxu0
        %1460 = vmatprep.mubr.f32.mxu0 0.0
        %1461 = vmatmul.mubr.f32.gmra.mxu0 %v1319
        %v1462 = vpop.f32.mrf.mxu0
        %v1463 = vadd.f32 %v1270, %v1462
        %v1464 = vpop.f32.mrf.mxu0
        %1465 = vdwg.mxu0
        %v1466 = vld [vmem:[%s658] sm:$0xff]
        %v1467 = vld [vmem:[%s658 + $0x8] sm:$0xff]
        %v1468 = vld [vmem:[%s658 + $0x10] sm:$0xff]
        %v1469 = vld [vmem:[%s658 + $0x18] sm:$0xff]
        %v1470 = vld [vmem:[%s658 + $0x20] sm:$0xff]
        %v1471 = vld [vmem:[%s658 + $0x28] sm:$0xff]
        %v1472 = vld [vmem:[%s658 + $0x30] sm:$0xff]
        %v1473 = vld [vmem:[%s658 + $0x38] sm:$0xff]
        %v1474 = vld [vmem:[%s658 + $0x40] sm:$0xff]
        %v1475 = vld [vmem:[%s658 + $0x48] sm:$0xff]
        %v1476 = vld [vmem:[%s658 + $0x50] sm:$0xff]
        %v1477 = vld [vmem:[%s658 + $0x58] sm:$0xff]
        %v1478 = vld [vmem:[%s658 + $0x60] sm:$0xff]
        %v1479 = vld [vmem:[%s658 + $0x68] sm:$0xff]
        %v1480 = vld [vmem:[%s658 + $0x70] sm:$0xff]
        %v1481 = vld [vmem:[%s658 + $0x78] sm:$0xff]
        %v1482 = vld [vmem:[%s8] sm:$0xff]
        %v1483 = vld [vmem:[%s8 + $0x8] sm:$0xff]
        %v1485 = vsel %vm1079, %v1466, 0
        %v1488 = vsel %vm1079, %v1467, 0
        %v1491 = vsel %vm1079, %v1468, 0
        %v1494 = vsel %vm1079, %v1469, 0
        %v1497 = vsel %vm1079, %v1470, 0
        %v1500 = vsel %vm1079, %v1471, 0
        %v1503 = vsel %vm1079, %v1472, 0
        %v1506 = vsel %vm1079, %v1473, 0
        %v1509 = vsel %vm1079, %v1474, 0
        %v1512 = vsel %vm1079, %v1475, 0
        %v1515 = vsel %vm1079, %v1476, 0
        %v1518 = vsel %vm1079, %v1477, 0
        %v1521 = vsel %vm1079, %v1478, 0
        %v1524 = vsel %vm1079, %v1479, 0
        %v1527 = vsel %vm1079, %v1480, 0
        %v1530 = vsel %vm1079, %v1481, 0
        %1532 = vmatprep.subr.mxu0 0.0
        %1533 = vmatpush1.msra.mxu0 0.0
        %1534 = vmatprep.subr.mxu0 0.0
        %1535 = vmatpush1.msra.mxu0 0.0
        %1536 = vmatprep.subr.mxu0 0.0
        %1537 = vmatpush1.msra.mxu0 0.0
        %1538 = vmatprep.subr.mxu0 0.0
        %1539 = vmatpush1.msra.mxu0 0.0
        %1540 = vmatprep.subr.mxu0 0.0
        %1541 = vmatpush1.msra.mxu0 0.0
        %1542 = vmatprep.subr.mxu0 0.0
        %1543 = vmatpush1.msra.mxu0 0.0
        %1544 = vmatprep.subr.mxu0 0.0
        %1545 = vmatpush1.msra.mxu0 0.0
        %1546 = vmatprep.subr.mxu0 0.0
        %1547 = vmatpush1.msra.mxu0 0.0
        %1548 = vmatprep.subr.mxu0 0.0
        %1549 = vmatpush1.msra.mxu0 0.0
        %1550 = vmatprep.subr.mxu0 0.0
        %1551 = vmatpush1.msra.mxu0 0.0
        %1552 = vmatprep.subr.mxu0 0.0
        %1553 = vmatpush1.msra.mxu0 0.0
        %1554 = vmatprep.subr.mxu0 0.0
        %1555 = vmatpush1.msra.mxu0 0.0
        %1556 = vmatprep.subr.mxu0 0.0
        %1557 = vmatpush1.msra.mxu0 0.0
        %1558 = vmatprep.subr.mxu0 0.0
        %1559 = vmatpush1.msra.mxu0 0.0
        %1560 = vmatprep.subr.mxu0 0.0
        %1561 = vmatpush1.msra.mxu0 %v1483
        %1562 = vmatprep.subr.mxu0 0.0
        %1563 = vmatpush1.msra.mxu0 %v1482
        %1564 = vmatprep.subr.mxu0 0.0
        %1565 = vmatpush2.msra.mxu0 0.0
        %1566 = vmatprep.subr.mxu0 0.0
        %1567 = vmatpush2.msra.mxu0 0.0
        %1568 = vmatprep.subr.mxu0 0.0
        %1569 = vmatpush2.msra.mxu0 0.0
        %1570 = vmatprep.subr.mxu0 0.0
        %1571 = vmatpush2.msra.mxu0 0.0
        %1572 = vmatprep.subr.mxu0 0.0
        %1573 = vmatpush2.msra.mxu0 0.0
        %1574 = vmatprep.subr.mxu0 0.0
        %1575 = vmatpush2.msra.mxu0 0.0
        %1576 = vmatprep.subr.mxu0 0.0
        %1577 = vmatpush2.msra.mxu0 0.0
        %1578 = vmatprep.subr.mxu0 0.0
        %1579 = vmatpush2.msra.mxu0 0.0
        %1580 = vmatprep.subr.mxu0 0.0
        %1581 = vmatpush2.msra.mxu0 0.0
        %1582 = vmatprep.subr.mxu0 0.0
        %1583 = vmatpush2.msra.mxu0 0.0
        %1584 = vmatprep.subr.mxu0 0.0
        %1585 = vmatpush2.msra.mxu0 0.0
        %1586 = vmatprep.subr.mxu0 0.0
        %1587 = vmatpush2.msra.mxu0 0.0
        %1588 = vmatprep.subr.mxu0 0.0
        %1589 = vmatpush2.msra.mxu0 0.0
        %1590 = vmatprep.subr.mxu0 0.0
        %1591 = vmatpush2.msra.mxu0 0.0
        %1592 = vmatprep.subr.mxu0 0.0
        %1593 = vmatpush2.msra.mxu0 0.0
        %1594 = vmatprep.subr.mxu0 0.0
        %1595 = vmatpush2.msra.mxu0 0.0
        %1596 = vmatprep.mubr.f32.mxu0 0.0
        %1597 = vmatmul.mubr.f32.gmra.mxu0 %v1485
        %v1598 = vpop.f32.mrf.mxu0
        %v1599 = vadd.f32 0.0, %v1598
        %v1600 = vpop.f32.mrf.mxu0
        %1601 = vmatprep.mubr.f32.mxu0 0.0
        %1602 = vmatmul.mubr.f32.gmra.mxu0 %v1488
        %v1603 = vpop.f32.mrf.mxu0
        %v1604 = vadd.f32 0.0, %v1603
        %v1605 = vpop.f32.mrf.mxu0
        %1606 = vmatprep.mubr.f32.mxu0 0.0
        %1607 = vmatmul.mubr.f32.gmra.mxu0 %v1491
        %v1608 = vpop.f32.mrf.mxu0
        %v1609 = vadd.f32 0.0, %v1608
        %v1610 = vpop.f32.mrf.mxu0
        %1611 = vmatprep.mubr.f32.mxu0 0.0
        %1612 = vmatmul.mubr.f32.gmra.mxu0 %v1494
        %v1613 = vpop.f32.mrf.mxu0
        %v1614 = vadd.f32 0.0, %v1613
        %v1615 = vpop.f32.mrf.mxu0
        %1616 = vmatprep.mubr.f32.mxu0 0.0
        %1617 = vmatmul.mubr.f32.gmra.mxu0 %v1497
        %v1618 = vpop.f32.mrf.mxu0
        %v1619 = vadd.f32 0.0, %v1618
        %v1620 = vpop.f32.mrf.mxu0
        %1621 = vmatprep.mubr.f32.mxu0 0.0
        %1622 = vmatmul.mubr.f32.gmra.mxu0 %v1500
        %v1623 = vpop.f32.mrf.mxu0
        %v1624 = vadd.f32 0.0, %v1623
        %v1625 = vpop.f32.mrf.mxu0
        %1626 = vmatprep.mubr.f32.mxu0 0.0
        %1627 = vmatmul.mubr.f32.gmra.mxu0 %v1503
        %v1628 = vpop.f32.mrf.mxu0
        %v1629 = vadd.f32 0.0, %v1628
        %v1630 = vpop.f32.mrf.mxu0
        %1631 = vmatprep.mubr.f32.mxu0 0.0
        %1632 = vmatmul.mubr.f32.gmra.mxu0 %v1506
        %v1633 = vpop.f32.mrf.mxu0
        %v1634 = vadd.f32 0.0, %v1633
        %v1635 = vpop.f32.mrf.mxu0
        %1636 = vmatprep.mubr.f32.mxu0 0.0
        %1637 = vmatmul.mubr.f32.gmra.mxu0 %v1509
        %v1638 = vpop.f32.mrf.mxu0
        %v1639 = vadd.f32 0.0, %v1638
        %v1640 = vpop.f32.mrf.mxu0
        %1641 = vmatprep.mubr.f32.mxu0 0.0
        %1642 = vmatmul.mubr.f32.gmra.mxu0 %v1512
        %v1643 = vpop.f32.mrf.mxu0
        %v1644 = vadd.f32 0.0, %v1643
        %v1645 = vpop.f32.mrf.mxu0
        %1646 = vmatprep.mubr.f32.mxu0 0.0
        %1647 = vmatmul.mubr.f32.gmra.mxu0 %v1515
        %v1648 = vpop.f32.mrf.mxu0
        %v1649 = vadd.f32 0.0, %v1648
        %v1650 = vpop.f32.mrf.mxu0
        %1651 = vmatprep.mubr.f32.mxu0 0.0
        %1652 = vmatmul.mubr.f32.gmra.mxu0 %v1518
        %v1653 = vpop.f32.mrf.mxu0
        %v1654 = vadd.f32 0.0, %v1653
        %v1655 = vpop.f32.mrf.mxu0
        %1656 = vmatprep.mubr.f32.mxu0 0.0
        %1657 = vmatmul.mubr.f32.gmra.mxu0 %v1521
        %v1658 = vpop.f32.mrf.mxu0
        %v1659 = vadd.f32 0.0, %v1658
        %v1660 = vpop.f32.mrf.mxu0
        %1661 = vmatprep.mubr.f32.mxu0 0.0
        %1662 = vmatmul.mubr.f32.gmra.mxu0 %v1524
        %v1663 = vpop.f32.mrf.mxu0
        %v1664 = vadd.f32 0.0, %v1663
        %v1665 = vpop.f32.mrf.mxu0
        %1666 = vmatprep.mubr.f32.mxu0 0.0
        %1667 = vmatmul.mubr.f32.gmra.mxu0 %v1527
        %v1668 = vpop.f32.mrf.mxu0
        %v1669 = vadd.f32 0.0, %v1668
        %v1670 = vpop.f32.mrf.mxu0
        %1671 = vmatprep.mubr.f32.mxu0 0.0
        %1672 = vmatmul.mubr.f32.gmra.mxu0 %v1530
        %v1673 = vpop.f32.mrf.mxu0
        %v1674 = vadd.f32 0.0, %v1673
        %v1675 = vpop.f32.mrf.mxu0
        %1676 = vdwg.mxu0
        %v1677 = vadd.f32 %v1388, %v1599
        %v1678 = vadd.f32 %v1393, %v1604
        %v1679 = vadd.f32 %v1398, %v1609
        %v1680 = vadd.f32 %v1403, %v1614
        %v1681 = vadd.f32 %v1408, %v1619
        %v1682 = vadd.f32 %v1413, %v1624
        %v1683 = vadd.f32 %v1418, %v1629
        %v1684 = vadd.f32 %v1423, %v1634
        %v1685 = vadd.f32 %v1428, %v1639
        %v1686 = vadd.f32 %v1433, %v1644
        %v1687 = vadd.f32 %v1438, %v1649
        %v1688 = vadd.f32 %v1443, %v1654
        %v1689 = vadd.f32 %v1448, %v1659
        %v1690 = vadd.f32 %v1453, %v1664
        %v1691 = vadd.f32 %v1458, %v1669
        %v1692 = vadd.f32 %v1463, %v1674
        %v1693 = vld [vmem:[%s9] sm:$0x1]
        %v1695 = vlaneseq
        %v1696 = vshrl.u32 %v1695, 7
        %v1697 = vsub.s32 0, %v1696
        %v1698 = vrot.slane %v1693, %v1697
        %v1700 = vadd.f32 %v1677, %v1698
        %v1701 = vadd.f32 %v1678, %v1698
        %v1702 = vadd.f32 %v1679, %v1698
        %v1703 = vadd.f32 %v1680, %v1698
        %v1704 = vadd.f32 %v1681, %v1698
        %v1705 = vadd.f32 %v1682, %v1698
        %v1706 = vadd.f32 %v1683, %v1698
        %v1707 = vadd.f32 %v1684, %v1698
        %v1708 = vadd.f32 %v1685, %v1698
        %v1709 = vadd.f32 %v1686, %v1698
        %v1710 = vadd.f32 %v1687, %v1698
        %v1711 = vadd.f32 %v1688, %v1698
        %v1712 = vadd.f32 %v1689, %v1698
        %v1713 = vadd.f32 %v1690, %v1698
        %v1714 = vadd.f32 %v1691, %v1698
        %v1715 = vadd.f32 %v1692, %v1698
        %v1716 = vmax.f32 %v1700, 0.0
        %v1717 = vmax.f32 %v1701, 0.0
        %v1718 = vmax.f32 %v1702, 0.0
        %v1719 = vmax.f32 %v1703, 0.0
        %v1720 = vmax.f32 %v1704, 0.0
        %v1721 = vmax.f32 %v1705, 0.0
        %v1722 = vmax.f32 %v1706, 0.0
        %v1723 = vmax.f32 %v1707, 0.0
        %v1724 = vmax.f32 %v1708, 0.0
        %v1725 = vmax.f32 %v1709, 0.0
        %v1726 = vmax.f32 %v1710, 0.0
        %v1727 = vmax.f32 %v1711, 0.0
        %v1728 = vmax.f32 %v1712, 0.0
        %v1729 = vmax.f32 %v1713, 0.0
        %v1730 = vmax.f32 %v1714, 0.0
        %v1731 = vmax.f32 %v1715, 0.0
        %v1732 = vld [vmem:[%s10] sm:$0xff]
        %v1733 = vld [vmem:[%s10 + $0x8] sm:$0xff]
        %v1734 = vld [vmem:[%s10 + $0x10] sm:$0xff]
        %v1735 = vld [vmem:[%s10 + $0x18] sm:$0xff]
        %v1736 = vld [vmem:[%s10 + $0x20] sm:$0xff]
        %v1737 = vld [vmem:[%s10 + $0x28] sm:$0xff]
        %v1738 = vld [vmem:[%s10 + $0x30] sm:$0xff]
        %v1739 = vld [vmem:[%s10 + $0x38] sm:$0xff]
        %v1740 = vld [vmem:[%s10 + $0x40] sm:$0xff]
        %v1741 = vld [vmem:[%s10 + $0x48] sm:$0xff]
        %v1742 = vld [vmem:[%s10 + $0x50] sm:$0xff]
        %v1743 = vld [vmem:[%s10 + $0x58] sm:$0xff]
        %v1744 = vld [vmem:[%s10 + $0x60] sm:$0xff]
        %v1745 = vld [vmem:[%s10 + $0x68] sm:$0xff]
        %v1746 = vld [vmem:[%s10 + $0x70] sm:$0xff]
        %v1747 = vld [vmem:[%s10 + $0x78] sm:$0xff]
        %v1748 = vld [vmem:[%s11] sm:$0x1]
        %v1750 = vlaneseq
        %v1751 = vshrl.u32 %v1750, 7
        %v1752 = vsub.s32 0, %v1751
        %v1753 = vrot.slane %v1748, %v1752
        %1755 = vmatprep.subr.mxu0 0.0
        %1756 = vmatpush1.msra.mxu0 %v1747
        %1757 = vmatprep.subr.mxu0 0.0
        %1758 = vmatpush1.msra.mxu0 %v1746
        %1759 = vmatprep.subr.mxu0 0.0
        %1760 = vmatpush1.msra.mxu0 %v1745
        %1761 = vmatprep.subr.mxu0 0.0
        %1762 = vmatpush1.msra.mxu0 %v1744
        %1763 = vmatprep.subr.mxu0 0.0
        %1764 = vmatpush1.msra.mxu0 %v1743
        %1765 = vmatprep.subr.mxu0 0.0
        %1766 = vmatpush1.msra.mxu0 %v1742
        %1767 = vmatprep.subr.mxu0 0.0
        %1768 = vmatpush1.msra.mxu0 %v1741
        %1769 = vmatprep.subr.mxu0 0.0
        %1770 = vmatpush1.msra.mxu0 %v1740
        %1771 = vmatprep.subr.mxu0 0.0
        %1772 = vmatpush1.msra.mxu0 %v1739
        %1773 = vmatprep.subr.mxu0 0.0
        %1774 = vmatpush1.msra.mxu0 %v1738
        %1775 = vmatprep.subr.mxu0 0.0
        %1776 = vmatpush1.msra.mxu0 %v1737
        %1777 = vmatprep.subr.mxu0 0.0
        %1778 = vmatpush1.msra.mxu0 %v1736
        %1779 = vmatprep.subr.mxu0 0.0
        %1780 = vmatpush1.msra.mxu0 %v1735
        %1781 = vmatprep.subr.mxu0 0.0
        %1782 = vmatpush1.msra.mxu0 %v1734
        %1783 = vmatprep.subr.mxu0 0.0
        %1784 = vmatpush1.msra.mxu0 %v1733
        %1785 = vmatprep.subr.mxu0 0.0
        %1786 = vmatpush1.msra.mxu0 %v1732
        %1787 = vmatprep.subr.mxu0 0.0
        %1788 = vmatpush2.msra.mxu0 0.0
        %1789 = vmatprep.subr.mxu0 0.0
        %1790 = vmatpush2.msra.mxu0 0.0
        %1791 = vmatprep.subr.mxu0 0.0
        %1792 = vmatpush2.msra.mxu0 0.0
        %1793 = vmatprep.subr.mxu0 0.0
        %1794 = vmatpush2.msra.mxu0 0.0
        %1795 = vmatprep.subr.mxu0 0.0
        %1796 = vmatpush2.msra.mxu0 0.0
        %1797 = vmatprep.subr.mxu0 0.0
        %1798 = vmatpush2.msra.mxu0 0.0
        %1799 = vmatprep.subr.mxu0 0.0
        %1800 = vmatpush2.msra.mxu0 0.0
        %1801 = vmatprep.subr.mxu0 0.0
        %1802 = vmatpush2.msra.mxu0 0.0
        %1803 = vmatprep.subr.mxu0 0.0
        %1804 = vmatpush2.msra.mxu0 0.0
        %1805 = vmatprep.subr.mxu0 0.0
        %1806 = vmatpush2.msra.mxu0 0.0
        %1807 = vmatprep.subr.mxu0 0.0
        %1808 = vmatpush2.msra.mxu0 0.0
        %1809 = vmatprep.subr.mxu0 0.0
        %1810 = vmatpush2.msra.mxu0 0.0
        %1811 = vmatprep.subr.mxu0 0.0
        %1812 = vmatpush2.msra.mxu0 0.0
        %1813 = vmatprep.subr.mxu0 0.0
        %1814 = vmatpush2.msra.mxu0 0.0
        %1815 = vmatprep.subr.mxu0 0.0
        %1816 = vmatpush2.msra.mxu0 0.0
        %1817 = vmatprep.subr.mxu0 0.0
        %1818 = vmatpush2.msra.mxu0 0.0
        %1819 = vmatprep.mubr.f32.mxu0 0.0
        %1820 = vmatmul.mubr.f32.gmra.mxu0 %v1716
        %v1821 = vpop.f32.mrf.mxu0
        %v1822 = vadd.f32 %v1753, %v1821
        %v1823 = vpop.f32.mrf.mxu0
        %1824 = vmatprep.mubr.f32.mxu0 0.0
        %1825 = vmatmul.mubr.f32.gmra.mxu0 %v1717
        %v1826 = vpop.f32.mrf.mxu0
        %v1827 = vadd.f32 %v1753, %v1826
        %v1828 = vpop.f32.mrf.mxu0
        %1829 = vmatprep.mubr.f32.mxu0 0.0
        %1830 = vmatmul.mubr.f32.gmra.mxu0 %v1718
        %v1831 = vpop.f32.mrf.mxu0
        %v1832 = vadd.f32 %v1753, %v1831
        %v1833 = vpop.f32.mrf.mxu0
        %1834 = vmatprep.mubr.f32.mxu0 0.0
        %1835 = vmatmul.mubr.f32.gmra.mxu0 %v1719
        %v1836 = vpop.f32.mrf.mxu0
        %v1837 = vadd.f32 %v1753, %v1836
        %v1838 = vpop.f32.mrf.mxu0
        %1839 = vmatprep.mubr.f32.mxu0 0.0
        %1840 = vmatmul.mubr.f32.gmra.mxu0 %v1720
        %v1841 = vpop.f32.mrf.mxu0
        %v1842 = vadd.f32 %v1753, %v1841
        %v1843 = vpop.f32.mrf.mxu0
        %1844 = vmatprep.mubr.f32.mxu0 0.0
        %1845 = vmatmul.mubr.f32.gmra.mxu0 %v1721
        %v1846 = vpop.f32.mrf.mxu0
        %v1847 = vadd.f32 %v1753, %v1846
        %v1848 = vpop.f32.mrf.mxu0
        %1849 = vmatprep.mubr.f32.mxu0 0.0
        %1850 = vmatmul.mubr.f32.gmra.mxu0 %v1722
        %v1851 = vpop.f32.mrf.mxu0
        %v1852 = vadd.f32 %v1753, %v1851
        %v1853 = vpop.f32.mrf.mxu0
        %1854 = vmatprep.mubr.f32.mxu0 0.0
        %1855 = vmatmul.mubr.f32.gmra.mxu0 %v1723
        %v1856 = vpop.f32.mrf.mxu0
        %v1857 = vadd.f32 %v1753, %v1856
        %v1858 = vpop.f32.mrf.mxu0
        %1859 = vmatprep.mubr.f32.mxu0 0.0
        %1860 = vmatmul.mubr.f32.gmra.mxu0 %v1724
        %v1861 = vpop.f32.mrf.mxu0
        %v1862 = vadd.f32 %v1753, %v1861
        %v1863 = vpop.f32.mrf.mxu0
        %1864 = vmatprep.mubr.f32.mxu0 0.0
        %1865 = vmatmul.mubr.f32.gmra.mxu0 %v1725
        %v1866 = vpop.f32.mrf.mxu0
        %v1867 = vadd.f32 %v1753, %v1866
        %v1868 = vpop.f32.mrf.mxu0
        %1869 = vmatprep.mubr.f32.mxu0 0.0
        %1870 = vmatmul.mubr.f32.gmra.mxu0 %v1726
        %v1871 = vpop.f32.mrf.mxu0
        %v1872 = vadd.f32 %v1753, %v1871
        %v1873 = vpop.f32.mrf.mxu0
        %1874 = vmatprep.mubr.f32.mxu0 0.0
        %1875 = vmatmul.mubr.f32.gmra.mxu0 %v1727
        %v1876 = vpop.f32.mrf.mxu0
        %v1877 = vadd.f32 %v1753, %v1876
        %v1878 = vpop.f32.mrf.mxu0
        %1879 = vmatprep.mubr.f32.mxu0 0.0
        %1880 = vmatmul.mubr.f32.gmra.mxu0 %v1728
        %v1881 = vpop.f32.mrf.mxu0
        %v1882 = vadd.f32 %v1753, %v1881
        %v1883 = vpop.f32.mrf.mxu0
        %1884 = vmatprep.mubr.f32.mxu0 0.0
        %1885 = vmatmul.mubr.f32.gmra.mxu0 %v1729
        %v1886 = vpop.f32.mrf.mxu0
        %v1887 = vadd.f32 %v1753, %v1886
        %v1888 = vpop.f32.mrf.mxu0
        %1889 = vmatprep.mubr.f32.mxu0 0.0
        %1890 = vmatmul.mubr.f32.gmra.mxu0 %v1730
        %v1891 = vpop.f32.mrf.mxu0
        %v1892 = vadd.f32 %v1753, %v1891
        %v1893 = vpop.f32.mrf.mxu0
        %1894 = vmatprep.mubr.f32.mxu0 0.0
        %1895 = vmatmul.mubr.f32.gmra.mxu0 %v1731
        %v1896 = vpop.f32.mrf.mxu0
        %v1897 = vadd.f32 %v1753, %v1896
        %v1898 = vpop.f32.mrf.mxu0
        %1899 = vdwg.mxu0
        %1900 = vst [vmem:[%s636] sm:$0xff] %v1822
        %1901 = vst [vmem:[%s636 + $0x8] sm:$0xff] %v1827
        %1902 = vst [vmem:[%s636 + $0x10] sm:$0xff] %v1832
        %1903 = vst [vmem:[%s636 + $0x18] sm:$0xff] %v1837
        %1904 = vst [vmem:[%s636 + $0x20] sm:$0xff] %v1842
        %1905 = vst [vmem:[%s636 + $0x28] sm:$0xff] %v1847
        %1906 = vst [vmem:[%s636 + $0x30] sm:$0xff] %v1852
        %1907 = vst [vmem:[%s636 + $0x38] sm:$0xff] %v1857
        %1908 = vst [vmem:[%s636 + $0x40] sm:$0xff] %v1862
        %1909 = vst [vmem:[%s636 + $0x48] sm:$0xff] %v1867
        %1910 = vst [vmem:[%s636 + $0x50] sm:$0xff] %v1872
        %1911 = vst [vmem:[%s636 + $0x58] sm:$0xff] %v1877
        %1912 = vst [vmem:[%s636 + $0x60] sm:$0xff] %v1882
        %1913 = vst [vmem:[%s636 + $0x68] sm:$0xff] %v1887
        %1914 = vst [vmem:[%s636 + $0x70] sm:$0xff] %v1892
        %1915 = vst [vmem:[%s636 + $0x78] sm:$0xff] %v1897
        %v1916 = vlaneseq
        %v1917 = vshrl.u32 %v1916, 7
        %v1918 = vadd.s32 %v1917, 8
        %v1919 = vld [vmem:[%s653] sm:$0x1]
        %v1920 = vlaneseq
        %v1921 = vshrl.u32 %v1920, 7
        %v1922 = vsub.s32 0, %v1921
        %v1923 = vrot.slane %v1919, %v1922
        %vm1924 = vcmp.eq.s32.totalorder %v1923, %v1917
        %vm1925 = vcmp.eq.s32.totalorder %v1923, %v1918
        %v1926 = vsel %vm1924, 1, 0
        %v1927 = vsel %vm1925, 1, 0
        %v1928 = vcvt.s32.f32 %v1926
        %v1929 = vcvt.s32.f32 %v1927
        %v1930 = vld [vmem:[#allocation4] sm:$0xff]
        %v1931 = vld [vmem:[#allocation4 + $0x8] sm:$0xff]
        %1932 = vmatprep.subr.mxu0 0.0
        %1933 = vmatpush1.msra.mxu0 %v1897
        %1934 = vmatprep.subr.mxu0 0.0
        %1935 = vmatpush1.msra.mxu0 %v1892
        %1936 = vmatprep.subr.mxu0 0.0
        %1937 = vmatpush1.msra.mxu0 %v1887
        %1938 = vmatprep.subr.mxu0 0.0
        %1939 = vmatpush1.msra.mxu0 %v1882
        %1940 = vmatprep.subr.mxu0 0.0
        %1941 = vmatpush1.msra.mxu0 %v1877
        %1942 = vmatprep.subr.mxu0 0.0
        %1943 = vmatpush1.msra.mxu0 %v1872
        %1944 = vmatprep.subr.mxu0 0.0
        %1945 = vmatpush1.msra.mxu0 %v1867
        %1946 = vmatprep.subr.mxu0 0.0
        %1947 = vmatpush1.msra.mxu0 %v1862
        %1948 = vmatprep.subr.mxu0 0.0
        %1949 = vmatpush1.msra.mxu0 %v1857
        %1950 = vmatprep.subr.mxu0 0.0
        %1951 = vmatpush1.msra.mxu0 %v1852
        %1952 = vmatprep.subr.mxu0 0.0
        %1953 = vmatpush1.msra.mxu0 %v1847
        %1954 = vmatprep.subr.mxu0 0.0
        %1955 = vmatpush1.msra.mxu0 %v1842
        %1956 = vmatprep.subr.mxu0 0.0
        %1957 = vmatpush1.msra.mxu0 %v1837
        %1958 = vmatprep.subr.mxu0 0.0
        %1959 = vmatpush1.msra.mxu0 %v1832
        %1960 = vmatprep.subr.mxu0 0.0
        %1961 = vmatpush1.msra.mxu0 %v1827
        %1962 = vmatprep.subr.mxu0 0.0
        %1963 = vmatpush1.msra.mxu0 %v1822
        %1964 = vmatprep.subr.mxu0 0.0
        %1965 = vmatpush2.msra.mxu0 0.0
        %1966 = vmatprep.subr.mxu0 0.0
        %1967 = vmatpush2.msra.mxu0 0.0
        %1968 = vmatprep.subr.mxu0 0.0
        %1969 = vmatpush2.msra.mxu0 0.0
        %1970 = vmatprep.subr.mxu0 0.0
        %1971 = vmatpush2.msra.mxu0 0.0
        %1972 = vmatprep.subr.mxu0 0.0
        %1973 = vmatpush2.msra.mxu0 0.0
        %1974 = vmatprep.subr.mxu0 0.0
        %1975 = vmatpush2.msra.mxu0 0.0
        %1976 = vmatprep.subr.mxu0 0.0
        %1977 = vmatpush2.msra.mxu0 0.0
        %1978 = vmatprep.subr.mxu0 0.0
        %1979 = vmatpush2.msra.mxu0 0.0
        %1980 = vmatprep.subr.mxu0 0.0
        %1981 = vmatpush2.msra.mxu0 0.0
        %1982 = vmatprep.subr.mxu0 0.0
        %1983 = vmatpush2.msra.mxu0 0.0
        %1984 = vmatprep.subr.mxu0 0.0
        %1985 = vmatpush2.msra.mxu0 0.0
        %1986 = vmatprep.subr.mxu0 0.0
        %1987 = vmatpush2.msra.mxu0 0.0
        %1988 = vmatprep.subr.mxu0 0.0
        %1989 = vmatpush2.msra.mxu0 0.0
        %1990 = vmatprep.subr.mxu0 0.0
        %1991 = vmatpush2.msra.mxu0 0.0
        %1992 = vmatprep.subr.mxu0 0.0
        %1993 = vmatpush2.msra.mxu0 0.0
        %1994 = vmatprep.subr.mxu0 0.0
        %1995 = vmatpush2.msra.mxu0 0.0
        %1996 = vmatprep.mubr.f32.mxu0 0.0
        %1997 = vmatmul.mubr.f32.gmra.mxu0 %v1928
        %v1998 = vpop.f32.mrf.mxu0
        %v1999 = vadd.f32 0.0, %v1998
        %v2000 = vpop.f32.mrf.mxu0
        %2001 = vmatprep.mubr.f32.mxu0 0.0
        %2002 = vmatmul.mubr.f32.gmra.mxu0 %v1929
        %v2003 = vpop.f32.mrf.mxu0
        %v2004 = vadd.f32 0.0, %v2003
        %v2005 = vpop.f32.mrf.mxu0
        %2006 = vdwg.mxu0
        %v2007 = vadd.f32 %v1930, %v1999
        %v2008 = vadd.f32 %v1931, %v2004
        %2009 = vst [vmem:[#allocation4] sm:$0xff] %v2007
        %2010 = vst [vmem:[#allocation4 + $0x8] sm:$0xff] %v2008
        %v2011 = vld [vmem:[#allocation5] sm:$0xff]
        %v2012 = vld [vmem:[#allocation5 + $0x8] sm:$0xff]
        %2013 = vmatprep.subr.mxu0 0.0
        %2014 = vmatpush1.msra.mxu0 1.0
        %2015 = vmatprep.subr.mxu0 0.0
        %2016 = vmatpush1.msra.mxu0 1.0
        %2017 = vmatprep.subr.mxu0 0.0
        %2018 = vmatpush1.msra.mxu0 1.0
        %2019 = vmatprep.subr.mxu0 0.0
        %2020 = vmatpush1.msra.mxu0 1.0
        %2021 = vmatprep.subr.mxu0 0.0
        %2022 = vmatpush1.msra.mxu0 1.0
        %2023 = vmatprep.subr.mxu0 0.0
        %2024 = vmatpush1.msra.mxu0 1.0
        %2025 = vmatprep.subr.mxu0 0.0
        %2026 = vmatpush1.msra.mxu0 1.0
        %2027 = vmatprep.subr.mxu0 0.0
        %2028 = vmatpush1.msra.mxu0 1.0
        %2029 = vmatprep.subr.mxu0 0.0
        %2030 = vmatpush1.msra.mxu0 1.0
        %2031 = vmatprep.subr.mxu0 0.0
        %2032 = vmatpush1.msra.mxu0 1.0
        %2033 = vmatprep.subr.mxu0 0.0
        %2034 = vmatpush1.msra.mxu0 1.0
        %2035 = vmatprep.subr.mxu0 0.0
        %2036 = vmatpush1.msra.mxu0 1.0
        %2037 = vmatprep.subr.mxu0 0.0
        %2038 = vmatpush1.msra.mxu0 1.0
        %2039 = vmatprep.subr.mxu0 0.0
        %2040 = vmatpush1.msra.mxu0 1.0
        %2041 = vmatprep.subr.mxu0 0.0
        %2042 = vmatpush1.msra.mxu0 1.0
        %2043 = vmatprep.subr.mxu0 0.0
        %2044 = vmatpush1.msra.mxu0 1.0
        %2045 = vmatprep.subr.mxu0 0.0
        %2046 = vmatpush2.msra.mxu0 0.0
        %2047 = vmatprep.subr.mxu0 0.0
        %2048 = vmatpush2.msra.mxu0 0.0
        %2049 = vmatprep.subr.mxu0 0.0
        %2050 = vmatpush2.msra.mxu0 0.0
        %2051 = vmatprep.subr.mxu0 0.0
        %2052 = vmatpush2.msra.mxu0 0.0
        %2053 = vmatprep.subr.mxu0 0.0
        %2054 = vmatpush2.msra.mxu0 0.0
        %2055 = vmatprep.subr.mxu0 0.0
        %2056 = vmatpush2.msra.mxu0 0.0
        %2057 = vmatprep.subr.mxu0 0.0
        %2058 = vmatpush2.msra.mxu0 0.0
        %2059 = vmatprep.subr.mxu0 0.0
        %2060 = vmatpush2.msra.mxu0 0.0
        %2061 = vmatprep.subr.mxu0 0.0
        %2062 = vmatpush2.msra.mxu0 0.0
        %2063 = vmatprep.subr.mxu0 0.0
        %2064 = vmatpush2.msra.mxu0 0.0
        %2065 = vmatprep.subr.mxu0 0.0
        %2066 = vmatpush2.msra.mxu0 0.0
        %2067 = vmatprep.subr.mxu0 0.0
        %2068 = vmatpush2.msra.mxu0 0.0
        %2069 = vmatprep.subr.mxu0 0.0
        %2070 = vmatpush2.msra.mxu0 0.0
        %2071 = vmatprep.subr.mxu0 0.0
        %2072 = vmatpush2.msra.mxu0 0.0
        %2073 = vmatprep.subr.mxu0 0.0
        %2074 = vmatpush2.msra.mxu0 0.0
        %2075 = vmatprep.subr.mxu0 0.0
        %2076 = vmatpush2.msra.mxu0 0.0
        %2077 = vmatprep.mubr.f32.mxu0 0.0
        %2078 = vmatmul.mubr.f32.gmra.mxu0 %v1928
        %v2079 = vpop.f32.mrf.mxu0
        %v2080 = vadd.f32 0.0, %v2079
        %v2081 = vpop.f32.mrf.mxu0
        %2082 = vmatprep.mubr.f32.mxu0 0.0
        %2083 = vmatmul.mubr.f32.gmra.mxu0 %v1929
        %v2084 = vpop.f32.mrf.mxu0
        %v2085 = vadd.f32 0.0, %v2084
        %v2086 = vpop.f32.mrf.mxu0
        %2087 = vdwg.mxu0
        %v2088 = vadd.f32 %v2011, %v2080
        %v2089 = vadd.f32 %v2012, %v2085
        %vm2090 = vcmask 7168
        %2091 = vst.msk [vmem:[#allocation5] sm:$0xff] %vm2090, %v2088
        %2092 = vst.msk [vmem:[#allocation5 + $0x8] sm:$0xff] %vm2090, %v2089
        %p2093 = scmp.eq.s32.totalorder %s35, 1
        // Predicated region
        $region97: #{tpu_custom_call.1} parent=91 // pred_check
          %p2094 = pneg %p2093
        $region98: #{tpu_custom_call.1} parent=91 // pred_check_branch
          %2096 = sbr.rel (%p2094) target = $region100
        $region99: #{tpu_custom_call.1} parent=91 // pred_region
          %v2097 = vld [vmem:[#allocation5] sm:$0xff]
          %v2098 = vld [vmem:[#allocation5 + $0x8] sm:$0xff]
          %vm2099 = vcmp.gt.f32.partialorder %v2097, 0.0
          %vm2100 = vcmp.gt.f32.partialorder %v2098, 0.0
          %v2101 = vld [vmem:[#allocation4] sm:$0xff]
          %v2102 = vld [vmem:[#allocation4 + $0x8] sm:$0xff]
          %v2103 = vmax.f32 %v2097, 1.0
          %v2104 = vmax.f32 %v2098, 1.0
          %2106 = vset.pattern.permute.xlu0 0
          %2107 = vperm.xlu0 %2106, %v2103
          %v2108 = vpop.permute.xlu0 %2107
          %2111 = vset.pattern.permute.xlu0 0
          %2112 = vperm.xlu0 %2111, %v2104
          %v2113 = vpop.permute.xlu0 %2112
          %v2115 = vrcp.pop %v2108
          %v2116 = vmul.f32 %v2101, %v2115
          %v2117 = vrcp.pop %v2113
          %v2118 = vmul.f32 %v2102, %v2117
          %v2119 = vsel %vm2099, 1, 0
          %v2120 = vsel %vm2100, 1, 0
          %2121 = vset.pattern.permute.xlu0 0
          %2122 = vperm.xlu0 %2121, %v2119
          %v2123 = vpop.permute.xlu0 %2122
          %2124 = vset.pattern.permute.xlu0 0
          %2125 = vperm.xlu0 %2124, %v2120
          %v2126 = vpop.permute.xlu0 %2125
          %vm2127 = vcmp.eq.s32.totalorder %v2123, 1
          %vm2128 = vcmp.eq.s32.totalorder %v2126, 1
          %v2129 = vsel %vm2127, %v2116, 0.0
          %v2130 = vsel %vm2128, %v2118, 0.0
          %v2131 = vld [vmem:[%s3] sm:$0xff]
          %v2132 = vld [vmem:[%s3 + $0x8] sm:$0xff]
          %v2133 = vld [vmem:[%s12] sm:$0xff]
          %v2134 = vld [vmem:[%s12 + $0x8] sm:$0xff]
          %v2135 = vld [vmem:[%s12 + $0x10] sm:$0xff]
          %v2136 = vld [vmem:[%s12 + $0x18] sm:$0xff]
          %v2137 = vld [vmem:[%s13] sm:$0xff]
          %v2138 = vld [vmem:[%s13 + $0x8] sm:$0xff]
          %v2139 = vld [vmem:[%s13 + $0x10] sm:$0xff]
          %v2140 = vld [vmem:[%s13 + $0x18] sm:$0xff]
          %v2141 = vld [vmem:[%s13 + $0x20] sm:$0xff]
          %v2142 = vld [vmem:[%s13 + $0x28] sm:$0xff]
          %v2143 = vld [vmem:[%s13 + $0x30] sm:$0xff]
          %v2144 = vld [vmem:[%s13 + $0x38] sm:$0xff]
          %v2145 = vld [vmem:[%s13 + $0x40] sm:$0xff]
          %v2146 = vld [vmem:[%s13 + $0x48] sm:$0xff]
          %v2147 = vld [vmem:[%s13 + $0x50] sm:$0xff]
          %v2148 = vld [vmem:[%s13 + $0x58] sm:$0xff]
          %v2149 = vld [vmem:[%s13 + $0x60] sm:$0xff]
          %v2150 = vld [vmem:[%s13 + $0x68] sm:$0xff]
          %v2151 = vld [vmem:[%s13 + $0x70] sm:$0xff]
          %v2152 = vld [vmem:[%s13 + $0x78] sm:$0xff]
          %2153 = vmatprep.subr.mxu0 0.0
          %2154 = vmatpush1.msra.mxu0 %v2152
          %2155 = vmatprep.subr.mxu0 0.0
          %2156 = vmatpush1.msra.mxu0 %v2151
          %2157 = vmatprep.subr.mxu0 0.0
          %2158 = vmatpush1.msra.mxu0 %v2150
          %2159 = vmatprep.subr.mxu0 0.0
          %2160 = vmatpush1.msra.mxu0 %v2149
          %2161 = vmatprep.subr.mxu0 0.0
          %2162 = vmatpush1.msra.mxu0 %v2148
          %2163 = vmatprep.subr.mxu0 0.0
          %2164 = vmatpush1.msra.mxu0 %v2147
          %2165 = vmatprep.subr.mxu0 0.0
          %2166 = vmatpush1.msra.mxu0 %v2146
          %2167 = vmatprep.subr.mxu0 0.0
          %2168 = vmatpush1.msra.mxu0 %v2145
          %2169 = vmatprep.subr.mxu0 0.0
          %2170 = vmatpush1.msra.mxu0 %v2144
          %2171 = vmatprep.subr.mxu0 0.0
          %2172 = vmatpush1.msra.mxu0 %v2143
          %2173 = vmatprep.subr.mxu0 0.0
          %2174 = vmatpush1.msra.mxu0 %v2142
          %2175 = vmatprep.subr.mxu0 0.0
          %2176 = vmatpush1.msra.mxu0 %v2141
          %2177 = vmatprep.subr.mxu0 0.0
          %2178 = vmatpush1.msra.mxu0 %v2140
          %2179 = vmatprep.subr.mxu0 0.0
          %2180 = vmatpush1.msra.mxu0 %v2139
          %2181 = vmatprep.subr.mxu0 0.0
          %2182 = vmatpush1.msra.mxu0 %v2138
          %2183 = vmatprep.subr.mxu0 0.0
          %2184 = vmatpush1.msra.mxu0 %v2137
          %2185 = vmatprep.subr.mxu0 0.0
          %2186 = vmatpush2.msra.mxu0 0.0
          %2187 = vmatprep.subr.mxu0 0.0
          %2188 = vmatpush2.msra.mxu0 0.0
          %2189 = vmatprep.subr.mxu0 0.0
          %2190 = vmatpush2.msra.mxu0 0.0
          %2191 = vmatprep.subr.mxu0 0.0
          %2192 = vmatpush2.msra.mxu0 0.0
          %2193 = vmatprep.subr.mxu0 0.0
          %2194 = vmatpush2.msra.mxu0 0.0
          %2195 = vmatprep.subr.mxu0 0.0
          %2196 = vmatpush2.msra.mxu0 0.0
          %2197 = vmatprep.subr.mxu0 0.0
          %2198 = vmatpush2.msra.mxu0 0.0
          %2199 = vmatprep.subr.mxu0 0.0
          %2200 = vmatpush2.msra.mxu0 0.0
          %2201 = vmatprep.subr.mxu0 0.0
          %2202 = vmatpush2.msra.mxu0 0.0
          %2203 = vmatprep.subr.mxu0 0.0
          %2204 = vmatpush2.msra.mxu0 0.0
          %2205 = vmatprep.subr.mxu0 0.0
          %2206 = vmatpush2.msra.mxu0 0.0
          %2207 = vmatprep.subr.mxu0 0.0
          %2208 = vmatpush2.msra.mxu0 0.0
          %2209 = vmatprep.subr.mxu0 0.0
          %2210 = vmatpush2.msra.mxu0 0.0
          %2211 = vmatprep.subr.mxu0 0.0
          %2212 = vmatpush2.msra.mxu0 0.0
          %2213 = vmatprep.subr.mxu0 0.0
          %2214 = vmatpush2.msra.mxu0 0.0
          %2215 = vmatprep.subr.mxu0 0.0
          %2216 = vmatpush2.msra.mxu0 0.0
          %2217 = vmatprep.mubr.f32.mxu0 0.0
          %2218 = vmatmul.mubr.f32.gmra.mxu0 %v2129
          %v2219 = vpop.f32.mrf.mxu0
          %v2220 = vadd.f32 0.0, %v2219
          %v2221 = vpop.f32.mrf.mxu0
          %2222 = vmatprep.mubr.f32.mxu0 0.0
          %2223 = vmatmul.mubr.f32.gmra.mxu0 %v2130
          %v2224 = vpop.f32.mrf.mxu0
          %v2225 = vadd.f32 0.0, %v2224
          %v2226 = vpop.f32.mrf.mxu0
          %2227 = vdwg.mxu0
          %vm2228 = vcmask 261120
          %v2230 = vsel %vm2228, %v2131, 0
          %v2233 = vsel %vm2228, %v2132, 0
          %2235 = vmatprep.subr.mxu0 0.0
          %2236 = vmatpush1.msra.mxu0 0.0
          %2237 = vmatprep.subr.mxu0 0.0
          %2238 = vmatpush1.msra.mxu0 0.0
          %2239 = vmatprep.subr.mxu0 0.0
          %2240 = vmatpush1.msra.mxu0 0.0
          %2241 = vmatprep.subr.mxu0 0.0
          %2242 = vmatpush1.msra.mxu0 0.0
          %2243 = vmatprep.subr.mxu0 0.0
          %2244 = vmatpush1.msra.mxu0 0.0
          %2245 = vmatprep.subr.mxu0 0.0
          %2246 = vmatpush1.msra.mxu0 0.0
          %2247 = vmatprep.subr.mxu0 0.0
          %2248 = vmatpush1.msra.mxu0 0.0
          %2249 = vmatprep.subr.mxu0 0.0
          %2250 = vmatpush1.msra.mxu0 0.0
          %2251 = vmatprep.subr.mxu0 0.0
          %2252 = vmatpush1.msra.mxu0 0.0
          %2253 = vmatprep.subr.mxu0 0.0
          %2254 = vmatpush1.msra.mxu0 0.0
          %2255 = vmatprep.subr.mxu0 0.0
          %2256 = vmatpush1.msra.mxu0 0.0
          %2257 = vmatprep.subr.mxu0 0.0
          %2258 = vmatpush1.msra.mxu0 0.0
          %2259 = vmatprep.subr.mxu0 0.0
          %2260 = vmatpush1.msra.mxu0 %v2136
          %2261 = vmatprep.subr.mxu0 0.0
          %2262 = vmatpush1.msra.mxu0 %v2135
          %2263 = vmatprep.subr.mxu0 0.0
          %2264 = vmatpush1.msra.mxu0 %v2134
          %2265 = vmatprep.subr.mxu0 0.0
          %2266 = vmatpush1.msra.mxu0 %v2133
          %2267 = vmatprep.subr.mxu0 0.0
          %2268 = vmatpush2.msra.mxu0 0.0
          %2269 = vmatprep.subr.mxu0 0.0
          %2270 = vmatpush2.msra.mxu0 0.0
          %2271 = vmatprep.subr.mxu0 0.0
          %2272 = vmatpush2.msra.mxu0 0.0
          %2273 = vmatprep.subr.mxu0 0.0
          %2274 = vmatpush2.msra.mxu0 0.0
          %2275 = vmatprep.subr.mxu0 0.0
          %2276 = vmatpush2.msra.mxu0 0.0
          %2277 = vmatprep.subr.mxu0 0.0
          %2278 = vmatpush2.msra.mxu0 0.0
          %2279 = vmatprep.subr.mxu0 0.0
          %2280 = vmatpush2.msra.mxu0 0.0
          %2281 = vmatprep.subr.mxu0 0.0
          %2282 = vmatpush2.msra.mxu0 0.0
          %2283 = vmatprep.subr.mxu0 0.0
          %2284 = vmatpush2.msra.mxu0 0.0
          %2285 = vmatprep.subr.mxu0 0.0
          %2286 = vmatpush2.msra.mxu0 0.0
          %2287 = vmatprep.subr.mxu0 0.0
          %2288 = vmatpush2.msra.mxu0 0.0
          %2289 = vmatprep.subr.mxu0 0.0
          %2290 = vmatpush2.msra.mxu0 0.0
          %2291 = vmatprep.subr.mxu0 0.0
          %2292 = vmatpush2.msra.mxu0 0.0
          %2293 = vmatprep.subr.mxu0 0.0
          %2294 = vmatpush2.msra.mxu0 0.0
          %2295 = vmatprep.subr.mxu0 0.0
          %2296 = vmatpush2.msra.mxu0 0.0
          %2297 = vmatprep.subr.mxu0 0.0
          %2298 = vmatpush2.msra.mxu0 0.0
          %2299 = vmatprep.mubr.f32.mxu0 0.0
          %2300 = vmatmul.mubr.f32.gmra.mxu0 %v2230
          %v2301 = vpop.f32.mrf.mxu0
          %v2302 = vadd.f32 %v2220, %v2301
          %v2303 = vpop.f32.mrf.mxu0
          %2304 = vmatprep.mubr.f32.mxu0 0.0
          %2305 = vmatmul.mubr.f32.gmra.mxu0 %v2233
          %v2306 = vpop.f32.mrf.mxu0
          %v2307 = vadd.f32 %v2225, %v2306
          %v2308 = vpop.f32.mrf.mxu0
          %2309 = vdwg.mxu0
          %v2310 = vld [vmem:[%s4] sm:$0xff]
          %v2311 = vld [vmem:[%s4 + $0x8] sm:$0xff]
          %v2312 = vld [vmem:[%s14] sm:$0xff]
          %vm2313 = vcmask 64512
          %v2315 = vsel %vm2313, %v2310, 0
          %v2318 = vsel %vm2313, %v2311, 0
          %2320 = vmatprep.subr.mxu0 0.0
          %2321 = vmatpush1.msra.mxu0 0.0
          %2322 = vmatprep.subr.mxu0 0.0
          %2323 = vmatpush1.msra.mxu0 0.0
          %2324 = vmatprep.subr.mxu0 0.0
          %2325 = vmatpush1.msra.mxu0 0.0
          %2326 = vmatprep.subr.mxu0 0.0
          %2327 = vmatpush1.msra.mxu0 0.0
          %2328 = vmatprep.subr.mxu0 0.0
          %2329 = vmatpush1.msra.mxu0 0.0
          %2330 = vmatprep.subr.mxu0 0.0
          %2331 = vmatpush1.msra.mxu0 0.0
          %2332 = vmatprep.subr.mxu0 0.0
          %2333 = vmatpush1.msra.mxu0 0.0
          %2334 = vmatprep.subr.mxu0 0.0
          %2335 = vmatpush1.msra.mxu0 0.0
          %2336 = vmatprep.subr.mxu0 0.0
          %2337 = vmatpush1.msra.mxu0 0.0
          %2338 = vmatprep.subr.mxu0 0.0
          %2339 = vmatpush1.msra.mxu0 0.0
          %2340 = vmatprep.subr.mxu0 0.0
          %2341 = vmatpush1.msra.mxu0 0.0
          %2342 = vmatprep.subr.mxu0 0.0
          %2343 = vmatpush1.msra.mxu0 0.0
          %2344 = vmatprep.subr.mxu0 0.0
          %2345 = vmatpush1.msra.mxu0 0.0
          %2346 = vmatprep.subr.mxu0 0.0
          %2347 = vmatpush1.msra.mxu0 0.0
          %2348 = vmatprep.subr.mxu0 0.0
          %2349 = vmatpush1.msra.mxu0 0.0
          %2350 = vmatprep.subr.mxu0 0.0
          %2351 = vmatpush1.msra.mxu0 %v2312
          %2352 = vmatprep.subr.mxu0 0.0
          %2353 = vmatpush2.msra.mxu0 0.0
          %2354 = vmatprep.subr.mxu0 0.0
          %2355 = vmatpush2.msra.mxu0 0.0
          %2356 = vmatprep.subr.mxu0 0.0
          %2357 = vmatpush2.msra.mxu0 0.0
          %2358 = vmatprep.subr.mxu0 0.0
          %2359 = vmatpush2.msra.mxu0 0.0
          %2360 = vmatprep.subr.mxu0 0.0
          %2361 = vmatpush2.msra.mxu0 0.0
          %2362 = vmatprep.subr.mxu0 0.0
          %2363 = vmatpush2.msra.mxu0 0.0
          %2364 = vmatprep.subr.mxu0 0.0
          %2365 = vmatpush2.msra.mxu0 0.0
          %2366 = vmatprep.subr.mxu0 0.0
          %2367 = vmatpush2.msra.mxu0 0.0
          %2368 = vmatprep.subr.mxu0 0.0
          %2369 = vmatpush2.msra.mxu0 0.0
          %2370 = vmatprep.subr.mxu0 0.0
          %2371 = vmatpush2.msra.mxu0 0.0
          %2372 = vmatprep.subr.mxu0 0.0
          %2373 = vmatpush2.msra.mxu0 0.0
          %2374 = vmatprep.subr.mxu0 0.0
          %2375 = vmatpush2.msra.mxu0 0.0
          %2376 = vmatprep.subr.mxu0 0.0
          %2377 = vmatpush2.msra.mxu0 0.0
          %2378 = vmatprep.subr.mxu0 0.0
          %2379 = vmatpush2.msra.mxu0 0.0
          %2380 = vmatprep.subr.mxu0 0.0
          %2381 = vmatpush2.msra.mxu0 0.0
          %2382 = vmatprep.subr.mxu0 0.0
          %2383 = vmatpush2.msra.mxu0 0.0
          %2384 = vmatprep.mubr.f32.mxu0 0.0
          %2385 = vmatmul.mubr.f32.gmra.mxu0 %v2315
          %v2386 = vpop.f32.mrf.mxu0
          %v2387 = vadd.f32 0.0, %v2386
          %v2388 = vpop.f32.mrf.mxu0
          %2389 = vmatprep.mubr.f32.mxu0 0.0
          %2390 = vmatmul.mubr.f32.gmra.mxu0 %v2318
          %v2391 = vpop.f32.mrf.mxu0
          %v2392 = vadd.f32 0.0, %v2391
          %v2393 = vpop.f32.mrf.mxu0
          %2394 = vdwg.mxu0
          %v2395 = vadd.f32 %v2302, %v2387
          %v2396 = vadd.f32 %v2307, %v2392
          %v2397 = vld [vmem:[%s15] sm:$0x1]
          %v2399 = vlaneseq
          %v2400 = vshrl.u32 %v2399, 7
          %v2401 = vsub.s32 0, %v2400
          %v2402 = vrot.slane %v2397, %v2401
          %v2404 = vadd.f32 %v2395, %v2402
          %v2405 = vadd.f32 %v2396, %v2402
          %v2406 = vmax.f32 %v2404, 0.0
          %v2407 = vmax.f32 %v2405, 0.0
          %v2408 = vld [vmem:[%s16] sm:$0xff]
          %v2409 = vld [vmem:[%s16 + $0x8] sm:$0xff]
          %v2410 = vld [vmem:[%s16 + $0x10] sm:$0xff]
          %v2411 = vld [vmem:[%s16 + $0x18] sm:$0xff]
          %v2412 = vld [vmem:[%s16 + $0x20] sm:$0xff]
          %v2413 = vld [vmem:[%s16 + $0x28] sm:$0xff]
          %v2414 = vld [vmem:[%s16 + $0x30] sm:$0xff]
          %v2415 = vld [vmem:[%s16 + $0x38] sm:$0xff]
          %v2416 = vld [vmem:[%s16 + $0x40] sm:$0xff]
          %v2417 = vld [vmem:[%s16 + $0x48] sm:$0xff]
          %v2418 = vld [vmem:[%s16 + $0x50] sm:$0xff]
          %v2419 = vld [vmem:[%s16 + $0x58] sm:$0xff]
          %v2420 = vld [vmem:[%s16 + $0x60] sm:$0xff]
          %v2421 = vld [vmem:[%s16 + $0x68] sm:$0xff]
          %v2422 = vld [vmem:[%s16 + $0x70] sm:$0xff]
          %v2423 = vld [vmem:[%s16 + $0x78] sm:$0xff]
          %v2424 = vld [vmem:[%s17] sm:$0x1]
          %v2426 = vlaneseq
          %v2427 = vshrl.u32 %v2426, 7
          %v2428 = vsub.s32 0, %v2427
          %v2429 = vrot.slane %v2424, %v2428
          %2431 = vmatprep.subr.mxu0 0.0
          %2432 = vmatpush1.msra.mxu0 %v2423
          %2433 = vmatprep.subr.mxu0 0.0
          %2434 = vmatpush1.msra.mxu0 %v2422
          %2435 = vmatprep.subr.mxu0 0.0
          %2436 = vmatpush1.msra.mxu0 %v2421
          %2437 = vmatprep.subr.mxu0 0.0
          %2438 = vmatpush1.msra.mxu0 %v2420
          %2439 = vmatprep.subr.mxu0 0.0
          %2440 = vmatpush1.msra.mxu0 %v2419
          %2441 = vmatprep.subr.mxu0 0.0
          %2442 = vmatpush1.msra.mxu0 %v2418
          %2443 = vmatprep.subr.mxu0 0.0
          %2444 = vmatpush1.msra.mxu0 %v2417
          %2445 = vmatprep.subr.mxu0 0.0
          %2446 = vmatpush1.msra.mxu0 %v2416
          %2447 = vmatprep.subr.mxu0 0.0
          %2448 = vmatpush1.msra.mxu0 %v2415
          %2449 = vmatprep.subr.mxu0 0.0
          %2450 = vmatpush1.msra.mxu0 %v2414
          %2451 = vmatprep.subr.mxu0 0.0
          %2452 = vmatpush1.msra.mxu0 %v2413
          %2453 = vmatprep.subr.mxu0 0.0
          %2454 = vmatpush1.msra.mxu0 %v2412
          %2455 = vmatprep.subr.mxu0 0.0
          %2456 = vmatpush1.msra.mxu0 %v2411
          %2457 = vmatprep.subr.mxu0 0.0
          %2458 = vmatpush1.msra.mxu0 %v2410
          %2459 = vmatprep.subr.mxu0 0.0
          %2460 = vmatpush1.msra.mxu0 %v2409
          %2461 = vmatprep.subr.mxu0 0.0
          %2462 = vmatpush1.msra.mxu0 %v2408
          %2463 = vmatprep.subr.mxu0 0.0
          %2464 = vmatpush2.msra.mxu0 0.0
          %2465 = vmatprep.subr.mxu0 0.0
          %2466 = vmatpush2.msra.mxu0 0.0
          %2467 = vmatprep.subr.mxu0 0.0
          %2468 = vmatpush2.msra.mxu0 0.0
          %2469 = vmatprep.subr.mxu0 0.0
          %2470 = vmatpush2.msra.mxu0 0.0
          %2471 = vmatprep.subr.mxu0 0.0
          %2472 = vmatpush2.msra.mxu0 0.0
          %2473 = vmatprep.subr.mxu0 0.0
          %2474 = vmatpush2.msra.mxu0 0.0
          %2475 = vmatprep.subr.mxu0 0.0
          %2476 = vmatpush2.msra.mxu0 0.0
          %2477 = vmatprep.subr.mxu0 0.0
          %2478 = vmatpush2.msra.mxu0 0.0
          %2479 = vmatprep.subr.mxu0 0.0
          %2480 = vmatpush2.msra.mxu0 0.0
          %2481 = vmatprep.subr.mxu0 0.0
          %2482 = vmatpush2.msra.mxu0 0.0
          %2483 = vmatprep.subr.mxu0 0.0
          %2484 = vmatpush2.msra.mxu0 0.0
          %2485 = vmatprep.subr.mxu0 0.0
          %2486 = vmatpush2.msra.mxu0 0.0
          %2487 = vmatprep.subr.mxu0 0.0
          %2488 = vmatpush2.msra.mxu0 0.0
          %2489 = vmatprep.subr.mxu0 0.0
          %2490 = vmatpush2.msra.mxu0 0.0
          %2491 = vmatprep.subr.mxu0 0.0
          %2492 = vmatpush2.msra.mxu0 0.0
          %2493 = vmatprep.subr.mxu0 0.0
          %2494 = vmatpush2.msra.mxu0 0.0
          %2495 = vmatprep.mubr.f32.mxu0 0.0
          %2496 = vmatmul.mubr.f32.gmra.mxu0 %v2406
          %v2497 = vpop.f32.mrf.mxu0
          %v2498 = vadd.f32 %v2429, %v2497
          %v2499 = vpop.f32.mrf.mxu0
          %2500 = vmatprep.mubr.f32.mxu0 0.0
          %2501 = vmatmul.mubr.f32.gmra.mxu0 %v2407
          %v2502 = vpop.f32.mrf.mxu0
          %v2503 = vadd.f32 %v2429, %v2502
          %v2504 = vpop.f32.mrf.mxu0
          %2505 = vdwg.mxu0
          %2506 = vst [vmem:[#allocation8] sm:$0xff] %v2498
          %2507 = vst [vmem:[#allocation8 + $0x8] sm:$0xff] %v2503
        $region100: #{tpu_custom_call.1} parent=91 // pred_fallthru
          _
        %s2508 = sand.u32 %s441, 1
        %s2509 = scalar_lea.sflag [#allocation7], %s2508
        %s2510 = sand.u32 %s441, 1
        %s2511 = smul.addr %s2510, 128
        %s2512 = scalar_lea.vmem [#allocation6], %s2511
        // Predicated region
        $region101: #{tpu_custom_call.1} parent=91 // pred_check
          %p2513 = pneg %p451
        $region102: #{tpu_custom_call.1} parent=91 // pred_check_branch
          %2515 = sbr.rel (%p2513) target = $region104
        $region103: #{tpu_custom_call.1} parent=91 // pred_region
          %s2516 = smul.u32 16, %s35
          %s2518 = ssub.s32 2048, 2048
          %2519 = vsyncadd %s2509, %s2518
          %s2520 = smul.addr %s2516, 128
          %s2521 = scalar_lea.hbm %s18, %s2520
          %s2522 = sshll.u32 %s2512, 4
          %s2523 = int_to_ptr.vmem [resolvable:$true] %s2522
          %2528 = dma.vmem_to_hbm [thread:$0]  %s2523, 2048, %s2521, %s2509, 128, 128, 8
        $region104: #{tpu_custom_call.1} parent=91 // pred_fallthru
          _
        // Predicated region
        $region105: #{tpu_custom_call.1} parent=91 // pred_check
          %p2529 = pneg %p472
        $region106: #{tpu_custom_call.1} parent=91 // pred_check_branch
          %2531 = sbr.rel (%p2529) target = $region108
        $region107: #{tpu_custom_call.1} parent=91 // pred_region
          %s2533 = ssub.s32 256, 256
          %2534 = vsyncadd [#allocation9], %s2533
          %s2535 = sshll.u32 [#allocation8], 4
          %s2536 = int_to_ptr.vmem [resolvable:$true] %s2535
          %2541 = dma.vmem_to_hbm [thread:$0]  %s2536, 256, %s19, [#allocation9], 128, 128, 8
        $region108: #{tpu_custom_call.1} parent=91 // pred_fallthru
          _
        // Predicated region
        $region109: #{tpu_custom_call.1} parent=91 // pred_check
          %p2542 = pneg %p472
        $region110: #{tpu_custom_call.1} parent=91 // pred_check_branch
          %2544 = sbr.rel (%p2542) target = $region112
        $region111: #{tpu_custom_call.1} parent=91 // pred_region
          %2545 = dma.done [#allocation9], 256
        $region112: #{tpu_custom_call.1} parent=91 // pred_fallthru
          _
      $region92: #{tpu_custom_call.1} parent=5 // pred_fallthru
        _
      %p2546 = scmp.le.s32.totalorder 2, %s30
      // Predicated region
      $region113: #{tpu_custom_call.1} parent=5 // pred_check
        %p2547 = pneg %p2546
      $region114: #{tpu_custom_call.1} parent=5 // pred_check_branch
        %2549 = sbr.rel (%p2547) target = $region116
      $region115: #{tpu_custom_call.1} parent=5 // pred_region
        %s2550 = ssub.s32 %s30, 2
        // Predicated region
        $region117: #{tpu_custom_call.1} parent=115 // pred_check
          %p2551 = pneg %p457
        $region118: #{tpu_custom_call.1} parent=115 // pred_check_branch
          %2553 = sbr.rel (%p2551) target = $region120
        $region119: #{tpu_custom_call.1} parent=115 // pred_region
          %s2554 = sand.u32 %s442, 1
          %s2555 = scalar_lea.sflag [#allocation7], %s2554
          %s2556 = sand.u32 %s442, 1
          %s2557 = smul.addr %s2556, 128
          %s2558 = scalar_lea.vmem [#allocation6], %s2557
          %2559 = dma.done %s2555, 2048
        $region120: #{tpu_custom_call.1} parent=115 // pred_fallthru
          _
      $region116: #{tpu_custom_call.1} parent=5 // pred_fallthru
        _
    $region6: #{tpu_custom_call.1} parent=1 // loop_footer
      %s34 = sadd.s32 1, %s30
    $region7: #{tpu_custom_call.1} parent=1 // loop_footer_branch
      %29 = sbr.rel target = $region3
    $region8: #{tpu_custom_call.1} parent=1 // loop_exit
      _
    %2560 = vsyncpa [#allocation7], 1
    %s2561 = scalar_lea.sflag [#allocation7], 1
    %2562 = vsyncpa %s2561, 1
    %2563 = vsyncpa [#allocation9], 1

</llo_original>
